<compile_context>
chip_gen: v7x
topology: tpu7x:2x2x1
jax: 0.10.0
libtpu: 0.0.40
codegen_flags: <defaults>
</compile_context>

<pallas_src>
import jax
import jax.numpy as jnp
from jax.experimental import pallas as pl
from jax.experimental.pallas import tpu as pltpu

EPS = 1e-5


# ----------------------------- fused kernel -------------------------------- #

def _make_block_kernel(stride, Ho, Wo, Cin, planes, downsample):
    """Fused BasicBlock kernel (one image per grid step).

    Implicit GEMM: 9 shifted windows per 3x3 conv, each a (Ho*Wo, K) x (K, Cout)
    bf16 matmul accumulated in f32.  Stride is pre-resolved by the host-side
    phase decomposition so every window slice below is contiguous (stride 1).
    """
    n_phase = stride * stride
    M = Ho * Wo
    taps = [(kh, kw) for kh in range(3) for kw in range(3)]

    def tap_origin(k):
        # 3x3 conv, pad=1: input index = stride*i - 1 + k.
        # -> (phase, start offset into the 1-padded phase tensor). All static.
        ph = (k - 1) % stride
        start = 1 + (k - 1 - ph) // stride
        return ph, start

    def kernel(*refs):
        xp = refs[:n_phase]                                    # phase tiles
        w1_ref, b1_ref, w2_ref, b2_ref = refs[n_phase:n_phase + 4]
        pos = n_phase + 4
        if downsample:
            wd_ref, bd_ref = refs[pos], refs[pos + 1]
            pos += 2
        o_ref = refs[pos]                                      # (1, M, planes)
        h1_ref = refs[pos + 1]                                 # VMEM scratch

        # ----- conv1 (3x3, stride) + bn1 (scale folded into w1) + relu -----
        acc = None
        for t, (kh, kw) in enumerate(taps):
            ph_h, sh = tap_origin(kh)
            ph_w, sw = tap_origin(kw)
            src = xp[ph_h * stride + ph_w]
            win = src[0, pl.ds(sh, Ho), pl.ds(sw, Wo), :]
            win = win.reshape(M, Cin).astype(jnp.bfloat16)
            part = jnp.dot(win, w1_ref[t], preferred_element_type=jnp.float32)
            acc = part if acc is None else acc + part
        h1 = jnp.maximum(acc + b1_ref[...], 0.0)

        # ----- stage h1 with a zero halo in VMEM (never touches HBM) --------
        h1_ref[...] = jnp.zeros(h1_ref.shape, h1_ref.dtype)
        h1_ref[pl.ds(1, Ho), pl.ds(1, Wo), :] = h1.reshape(Ho, Wo, planes)

        # ----- conv2 (3x3, stride 1, pad 1) + bn2 (scale folded into w2) ----
        acc2 = None
        for t, (kh, kw) in enumerate(taps):
            win = h1_ref[pl.ds(kh, Ho), pl.ds(kw, Wo), :]
            win = win.reshape(M, planes).astype(jnp.bfloat16)
            part = jnp.dot(win, w2_ref[t], preferred_element_type=jnp.float32)
            acc2 = part if acc2 is None else acc2 + part
        out = acc2 + b2_ref[...]

        # ----- residual (identity or folded-BN 1x1-conv downsample) + relu --
        # phase(0,0) interior == x[::stride, ::stride] -- already in VMEM.
        x_c = xp[0][0, pl.ds(1, Ho), pl.ds(1, Wo), :].reshape(M, Cin)
        if downsample:
            res = jnp.dot(x_c.astype(jnp.bfloat16), wd_ref[...],
                          preferred_element_type=jnp.float32) + bd_ref[...]
        else:
            res = x_c                       # identity path: Cin == planes, f32

        o_ref[0] = jnp.maximum(out + res, 0.0)

    return kernel


# --------------------------- host-side helpers ------------------------------ #

def _fold_bn(bn):
    gamma, beta, mean, var = bn
    scale = gamma / jnp.sqrt(var + EPS)
    bias = beta - mean * scale
    return scale, bias


def _prep_conv3x3(w, bn):
    """Torch conv weight (Cout,Cin,3,3) + BN -> ((9,Cin,Cout) bf16, (1,Cout) f32)."""
    cout, cin = w.shape[0], w.shape[1]
    scale, bias = _fold_bn(bn)
    wm = jnp.transpose(w, (2, 3, 1, 0)).reshape(9, cin, cout)   # tap = kh*3+kw
    wm = (wm * scale[None, None, :]).astype(jnp.bfloat16)
    return wm, bias.reshape(1, cout).astype(jnp.float32)


def _prep_conv1x1(w, bn):
    """Torch conv weight (Cout,Cin,1,1) + BN -> ((Cin,Cout) bf16, (1,Cout) f32)."""
    cout = w.shape[0]
    scale, bias = _fold_bn(bn)
    wm = (jnp.transpose(w[:, :, 0, 0], (1, 0)) * scale[None, :]).astype(jnp.bfloat16)
    return wm, bias.reshape(1, cout).astype(jnp.float32)


def _phase_decompose(x_nhwc, stride):
    """x -> stride*stride zero-padded stride-1 phase tensors (N, H/s+2, W/s+2, C).

    Tap (kh, kw) of a 3x3/pad-1/stride-s conv reads a contiguous window of
    phase ((kh-1)%s, (kw-1)%s); phase (0,0)'s interior is x[::s, ::s] (used for
    the residual / 1x1 downsample).  One cheap HBM pass over x."""
    phases = []
    for a in range(stride):
        for b in range(stride):
            p = x_nhwc[:, a::stride, b::stride, :]
            phases.append(jnp.pad(p, ((0, 0), (1, 1), (1, 1), (0, 0))))
    return phases


def basic_block_forward(x_nchw, params, stride):
    x = jnp.transpose(x_nchw, (0, 2, 3, 1)).astype(jnp.float32)      # NHWC
    N, H, W, Cin = x.shape
    planes = params["w1"].shape[0]
    assert H % stride == 0 and W % stride == 0, "spatial dims must divide stride"
    Ho, Wo = H // stride, W // stride
    M = Ho * Wo
    downsample = (stride != 1) or (Cin != planes)

    phases = _phase_decompose(x, stride)
    w1, b1 = _prep_conv3x3(params["w1"], params["bn1"])
    w2, b2 = _prep_conv3x3(params["w2"], params["bn2"])
    operands = phases + [w1, b1, w2, b2]

    phase_spec = pl.BlockSpec((1, Ho + 2, Wo + 2, Cin), lambda n: (n, 0, 0, 0))
    in_specs = [phase_spec] * (stride * stride)
    in_specs += [pl.BlockSpec(w1.shape, lambda n: (0, 0, 0)),
                 pl.BlockSpec(b1.shape, lambda n: (0, 0)),
                 pl.BlockSpec(w2.shape, lambda n: (0, 0, 0)),
                 pl.BlockSpec(b2.shape, lambda n: (0, 0))]
    if downsample:
        wd, bd = _prep_conv1x1(params["wd"], params["bnd"])
        operands += [wd, bd]
        in_specs += [pl.BlockSpec(wd.shape, lambda n: (0, 0)),
                     pl.BlockSpec(bd.shape, lambda n: (0, 0))]

    flops = 2 * N * M * planes * (9 * Cin + 9 * planes
                                  + (Cin if downsample else 0))
    bytes_acc = int(sum(int(a.size) * a.dtype.itemsize for a in operands)
                    + N * M * planes * 4)

    kernel = _make_block_kernel(stride, Ho, Wo, Cin, planes, downsample)

    out = pl.pallas_call(
        kernel,
        out_shape=jax.ShapeDtypeStruct((N, M, planes), jnp.float32),
        grid=(N,),
        in_specs=in_specs,
        out_specs=pl.BlockSpec((1, M, planes), lambda n: (n, 0, 0)),
        scratch_shapes=[pltpu.VMEM((Ho + 2, Wo + 2, planes), jnp.float32)],
        compiler_params=pltpu.CompilerParams(
            dimension_semantics=("parallel",),
            vmem_limit_bytes=32 * 1024 * 1024,
        ),
        cost_estimate=pl.CostEstimate(flops=int(flops), transcendentals=0,
                                      bytes_accessed=bytes_acc),
    )(*operands)

    out = out.reshape(N, Ho, Wo, planes)
    return jnp.transpose(out, (0, 3, 1, 2))                          # NCHW


# --------------------------- pure-JAX reference ----------------------------- #

def _ref_conv(x_nhwc, w_torch, stride, pad):
    w = jnp.transpose(w_torch, (2, 3, 1, 0))                         # HWIO
    return jax.lax.conv_general_dilated(
        x_nhwc, w, (stride, stride), [(pad, pad), (pad, pad)],
        dimension_numbers=("NHWC", "HWIO", "NHWC"))


def reference_forward(x_nchw, params, stride):
    x = jnp.transpose(x_nchw, (0, 2, 3, 1)).astype(jnp.float32)

    def bn(y, p):
        g, b, m, v = p
        return g * (y - m) / jnp.sqrt(v + EPS) + b

    planes = params["w1"].shape[0]
    cin = params["w1"].shape[1]
    out = jnp.maximum(bn(_ref_conv(x, params["w1"], stride, 1), params["bn1"]), 0.0)
    out = bn(_ref_conv(out, params["w2"], 1, 1), params["bn2"])
    if stride != 1 or cin != planes:
        res = bn(_ref_conv(x, params["wd"], stride, 0), params["bnd"])
    else:
        res = x
    out = jnp.maximum(out + res, 0.0)
    return jnp.transpose(out, (0, 3, 1, 2))


# --------------------------------- main ------------------------------------- #

def make_params(key, inplanes, planes):
    ks = jax.random.split(key, 16)

    def bn_params(k, c):
        k1, k2, k3, k4 = jax.random.split(k, 4)
        gamma = 1.0 + 0.1 * jax.random.normal(k1, (c,), jnp.float32)
        beta = 0.1 * jax.random.normal(k2, (c,), jnp.float32)
        mean = 0.1 * jax.random.normal(k3, (c,), jnp.float32)
        var = 0.5 + jax.random.uniform(k4, (c,), jnp.float32)
        return (gamma, beta, mean, var)

    return {
        "w1": 0.1 * jax.random.normal(ks[0], (planes, inplanes, 3, 3), jnp.float32),
        "bn1": bn_params(ks[1], planes),
        "w2": 0.1 * jax.random.normal(ks[2], (planes, planes, 3, 3), jnp.float32),
        "bn2": bn_params(ks[3], planes),
        "wd": 0.1 * jax.random.normal(ks[4], (planes, inplanes, 1, 1), jnp.float32),
        "bnd": bn_params(ks[5], planes),
    }


if __name__ == "__main__":
    key = jax.random.PRNGKey(0)

    configs = [
        # (N, inplanes, H, W, planes, stride)
        (2, 8, 16, 16, 16, 2),    # downsample path: stride-2 conv1 + 1x1-conv skip
        (2, 16, 32, 32, 16, 1),   # identity path
    ]

    for idx, (N, cin, H, W, planes, stride) in enumerate(configs):
        kx, kp = jax.random.split(jax.random.fold_in(key, idx))
        x = jax.random.normal(kx, (N, cin, H, W), jnp.float32)       # NCHW
        params = make_params(kp, cin, planes)

        out = jax.block_until_ready(basic_block_forward(x, params, stride))
        ref = jax.block_until_ready(reference_forward(x, params, stride))

        assert out.shape == (N, planes, H // stride, W // stride), out.shape
        err = float(jnp.max(jnp.abs(out - ref)))
        ref_scale = float(jnp.max(jnp.abs(ref)))
        # bf16 MXU operands (activations + scale-folded weights) with f32 accum
        assert err <= 0.05 * ref_scale + 0.05, (idx, err, ref_scale)

    print("KERNEL_OK")
</pallas_src>

<mosaic_0001>
module attributes {stable_mosaic.version = 11 : i64} {
  func.func @kernel(%arg0: i32, %arg1: memref<1x10x10x8xf32, #tpu.memory_space<vmem>>, %arg2: memref<1x10x10x8xf32, #tpu.memory_space<vmem>>, %arg3: memref<1x10x10x8xf32, #tpu.memory_space<vmem>>, %arg4: memref<1x10x10x8xf32, #tpu.memory_space<vmem>>, %arg5: memref<9x8x16xbf16, #tpu.memory_space<vmem>>, %arg6: memref<1x16xf32, #tpu.memory_space<vmem>>, %arg7: memref<9x16x16xbf16, #tpu.memory_space<vmem>>, %arg8: memref<1x16xf32, #tpu.memory_space<vmem>>, %arg9: memref<8x16xbf16, #tpu.memory_space<vmem>>, %arg10: memref<1x16xf32, #tpu.memory_space<vmem>>, %arg11: memref<1x64x16xf32, #tpu.memory_space<vmem>>, %arg12: memref<10x10x16xf32, #tpu.memory_space<vmem>>) attributes {dimension_semantics = [#tpu.dimension_semantics<parallel>], iteration_bounds = array<i64: 2>, scalar_prefetch = 0 : i64, scratch_operands = 1 : i64, tpu.core_type = #tpu.core_type<tc>, window_params = [{transform_indices = @transform_0, window_bounds = array<i64: 1, 10, 10, 8>}, {transform_indices = @transform_1, window_bounds = array<i64: 1, 10, 10, 8>}, {transform_indices = @transform_2, window_bounds = array<i64: 1, 10, 10, 8>}, {transform_indices = @transform_3, window_bounds = array<i64: 1, 10, 10, 8>}, {pipeline_mode = #tpu.pipeline_mode<synchronous>, transform_indices = @transform_4, window_bounds = array<i64: 9, 8, 16>}, {pipeline_mode = #tpu.pipeline_mode<synchronous>, transform_indices = @transform_5, window_bounds = array<i64: 1, 16>}, {pipeline_mode = #tpu.pipeline_mode<synchronous>, transform_indices = @transform_6, window_bounds = array<i64: 9, 16, 16>}, {pipeline_mode = #tpu.pipeline_mode<synchronous>, transform_indices = @transform_7, window_bounds = array<i64: 1, 16>}, {pipeline_mode = #tpu.pipeline_mode<synchronous>, transform_indices = @transform_8, window_bounds = array<i64: 8, 16>}, {pipeline_mode = #tpu.pipeline_mode<synchronous>, transform_indices = @transform_9, window_bounds = array<i64: 1, 16>}, {transform_indices = @transform_10, window_bounds = array<i64: 1, 64, 16>}]} {
    %c0 = arith.constant 0 : index
    %c0_0 = arith.constant 0 : index
    %c0_1 = arith.constant 0 : index
    %c0_2 = arith.constant 0 : index
    %0 = vector.load %arg4[%c0, %c0_0, %c0_1, %c0_2] : memref<1x10x10x8xf32, #tpu.memory_space<vmem>>, vector<1x8x8x8xf32>
    %1 = vector.shape_cast %0 : vector<1x8x8x8xf32> to vector<8x8x8xf32>
    %2 = vector.shape_cast %1 : vector<8x8x8xf32> to vector<64x8xf32>
    %3 = arith.truncf %2 : vector<64x8xf32> to vector<64x8xbf16>
    %c0_3 = arith.constant 0 : index
    %c0_4 = arith.constant 0 : index
    %c0_5 = arith.constant 0 : index
    %4 = vector.load %arg5[%c0_3, %c0_4, %c0_5] : memref<9x8x16xbf16, #tpu.memory_space<vmem>>, vector<1x8x16xbf16>
    %5 = vector.shape_cast %4 : vector<1x8x16xbf16> to vector<8x16xbf16>
    %cst = arith.constant dense<0.000000e+00> : vector<64x16xf32>
    %6 = tpu.matmul %3, %5, %cst {dimension_numbers = #tpu.dot_dimension_numbers<[1], [0], [0], [1], [0, 0, 1, 1], [], []>} : vector<64x8xbf16>, vector<8x16xbf16>, vector<64x16xf32> -> vector<64x16xf32>
    %c0_6 = arith.constant 0 : index
    %c0_7 = arith.constant 0 : index
    %c1 = arith.constant 1 : index
    %c0_8 = arith.constant 0 : index
    %7 = vector.load %arg3[%c0_6, %c0_7, %c1, %c0_8] : memref<1x10x10x8xf32, #tpu.memory_space<vmem>>, vector<1x8x8x8xf32>
    %8 = vector.shape_cast %7 : vector<1x8x8x8xf32> to vector<8x8x8xf32>
    %9 = vector.shape_cast %8 : vector<8x8x8xf32> to vector<64x8xf32>
    %10 = arith.truncf %9 : vector<64x8xf32> to vector<64x8xbf16>
    %c1_9 = arith.constant 1 : index
    %c0_10 = arith.constant 0 : index
    %c0_11 = arith.constant 0 : index
    %11 = vector.load %arg5[%c1_9, %c0_10, %c0_11] : memref<9x8x16xbf16, #tpu.memory_space<vmem>>, vector<1x8x16xbf16>
    %12 = vector.shape_cast %11 : vector<1x8x16xbf16> to vector<8x16xbf16>
    %cst_12 = arith.constant dense<0.000000e+00> : vector<64x16xf32>
    %13 = tpu.matmul %10, %12, %cst_12 {dimension_numbers = #tpu.dot_dimension_numbers<[1], [0], [0], [1], [0, 0, 1, 1], [], []>} : vector<64x8xbf16>, vector<8x16xbf16>, vector<64x16xf32> -> vector<64x16xf32>
    %14 = arith.addf %6, %13 : vector<64x16xf32>
    %c0_13 = arith.constant 0 : index
    %c0_14 = arith.constant 0 : index
    %c1_15 = arith.constant 1 : index
    %c0_16 = arith.constant 0 : index
    %15 = vector.load %arg4[%c0_13, %c0_14, %c1_15, %c0_16] : memref<1x10x10x8xf32, #tpu.memory_space<vmem>>, vector<1x8x8x8xf32>
    %16 = vector.shape_cast %15 : vector<1x8x8x8xf32> to vector<8x8x8xf32>
    %17 = vector.shape_cast %16 : vector<8x8x8xf32> to vector<64x8xf32>
    %18 = arith.truncf %17 : vector<64x8xf32> to vector<64x8xbf16>
    %c2 = arith.constant 2 : index
    %c0_17 = arith.constant 0 : index
    %c0_18 = arith.constant 0 : index
    %19 = vector.load %arg5[%c2, %c0_17, %c0_18] : memref<9x8x16xbf16, #tpu.memory_space<vmem>>, vector<1x8x16xbf16>
    %20 = vector.shape_cast %19 : vector<1x8x16xbf16> to vector<8x16xbf16>
    %cst_19 = arith.constant dense<0.000000e+00> : vector<64x16xf32>
    %21 = tpu.matmul %18, %20, %cst_19 {dimension_numbers = #tpu.dot_dimension_numbers<[1], [0], [0], [1], [0, 0, 1, 1], [], []>} : vector<64x8xbf16>, vector<8x16xbf16>, vector<64x16xf32> -> vector<64x16xf32>
    %22 = arith.addf %14, %21 : vector<64x16xf32>
    %c0_20 = arith.constant 0 : index
    %c1_21 = arith.constant 1 : index
    %c0_22 = arith.constant 0 : index
    %c0_23 = arith.constant 0 : index
    %23 = vector.load %arg2[%c0_20, %c1_21, %c0_22, %c0_23] : memref<1x10x10x8xf32, #tpu.memory_space<vmem>>, vector<1x8x8x8xf32>
    %24 = vector.shape_cast %23 : vector<1x8x8x8xf32> to vector<8x8x8xf32>
    %25 = vector.shape_cast %24 : vector<8x8x8xf32> to vector<64x8xf32>
    %26 = arith.truncf %25 : vector<64x8xf32> to vector<64x8xbf16>
    %c3 = arith.constant 3 : index
    %c0_24 = arith.constant 0 : index
    %c0_25 = arith.constant 0 : index
    %27 = vector.load %arg5[%c3, %c0_24, %c0_25] : memref<9x8x16xbf16, #tpu.memory_space<vmem>>, vector<1x8x16xbf16>
    %28 = vector.shape_cast %27 : vector<1x8x16xbf16> to vector<8x16xbf16>
    %cst_26 = arith.constant dense<0.000000e+00> : vector<64x16xf32>
    %29 = tpu.matmul %26, %28, %cst_26 {dimension_numbers = #tpu.dot_dimension_numbers<[1], [0], [0], [1], [0, 0, 1, 1], [], []>} : vector<64x8xbf16>, vector<8x16xbf16>, vector<64x16xf32> -> vector<64x16xf32>
    %30 = arith.addf %22, %29 : vector<64x16xf32>
    %c0_27 = arith.constant 0 : index
    %c1_28 = arith.constant 1 : index
    %c1_29 = arith.constant 1 : index
    %c0_30 = arith.constant 0 : index
    %31 = vector.load %arg1[%c0_27, %c1_28, %c1_29, %c0_30] : memref<1x10x10x8xf32, #tpu.memory_space<vmem>>, vector<1x8x8x8xf32>
    %32 = vector.shape_cast %31 : vector<1x8x8x8xf32> to vector<8x8x8xf32>
    %33 = vector.shape_cast %32 : vector<8x8x8xf32> to vector<64x8xf32>
    %34 = arith.truncf %33 : vector<64x8xf32> to vector<64x8xbf16>
    %c4 = arith.constant 4 : index
    %c0_31 = arith.constant 0 : index
    %c0_32 = arith.constant 0 : index
    %35 = vector.load %arg5[%c4, %c0_31, %c0_32] : memref<9x8x16xbf16, #tpu.memory_space<vmem>>, vector<1x8x16xbf16>
    %36 = vector.shape_cast %35 : vector<1x8x16xbf16> to vector<8x16xbf16>
    %cst_33 = arith.constant dense<0.000000e+00> : vector<64x16xf32>
    %37 = tpu.matmul %34, %36, %cst_33 {dimension_numbers = #tpu.dot_dimension_numbers<[1], [0], [0], [1], [0, 0, 1, 1], [], []>} : vector<64x8xbf16>, vector<8x16xbf16>, vector<64x16xf32> -> vector<64x16xf32>
    %38 = arith.addf %30, %37 : vector<64x16xf32>
    %c0_34 = arith.constant 0 : index
    %c1_35 = arith.constant 1 : index
    %c1_36 = arith.constant 1 : index
    %c0_37 = arith.constant 0 : index
    %39 = vector.load %arg2[%c0_34, %c1_35, %c1_36, %c0_37] : memref<1x10x10x8xf32, #tpu.memory_space<vmem>>, vector<1x8x8x8xf32>
    %40 = vector.shape_cast %39 : vector<1x8x8x8xf32> to vector<8x8x8xf32>
    %41 = vector.shape_cast %40 : vector<8x8x8xf32> to vector<64x8xf32>
    %42 = arith.truncf %41 : vector<64x8xf32> to vector<64x8xbf16>
    %c5 = arith.constant 5 : index
    %c0_38 = arith.constant 0 : index
    %c0_39 = arith.constant 0 : index
    %43 = vector.load %arg5[%c5, %c0_38, %c0_39] : memref<9x8x16xbf16, #tpu.memory_space<vmem>>, vector<1x8x16xbf16>
    %44 = vector.shape_cast %43 : vector<1x8x16xbf16> to vector<8x16xbf16>
    %cst_40 = arith.constant dense<0.000000e+00> : vector<64x16xf32>
    %45 = tpu.matmul %42, %44, %cst_40 {dimension_numbers = #tpu.dot_dimension_numbers<[1], [0], [0], [1], [0, 0, 1, 1], [], []>} : vector<64x8xbf16>, vector<8x16xbf16>, vector<64x16xf32> -> vector<64x16xf32>
    %46 = arith.addf %38, %45 : vector<64x16xf32>
    %c0_41 = arith.constant 0 : index
    %c1_42 = arith.constant 1 : index
    %c0_43 = arith.constant 0 : index
    %c0_44 = arith.constant 0 : index
    %47 = vector.load %arg4[%c0_41, %c1_42, %c0_43, %c0_44] : memref<1x10x10x8xf32, #tpu.memory_space<vmem>>, vector<1x8x8x8xf32>
    %48 = vector.shape_cast %47 : vector<1x8x8x8xf32> to vector<8x8x8xf32>
    %49 = vector.shape_cast %48 : vector<8x8x8xf32> to vector<64x8xf32>
    %50 = arith.truncf %49 : vector<64x8xf32> to vector<64x8xbf16>
    %c6 = arith.constant 6 : index
    %c0_45 = arith.constant 0 : index
    %c0_46 = arith.constant 0 : index
    %51 = vector.load %arg5[%c6, %c0_45, %c0_46] : memref<9x8x16xbf16, #tpu.memory_space<vmem>>, vector<1x8x16xbf16>
    %52 = vector.shape_cast %51 : vector<1x8x16xbf16> to vector<8x16xbf16>
    %cst_47 = arith.constant dense<0.000000e+00> : vector<64x16xf32>
    %53 = tpu.matmul %50, %52, %cst_47 {dimension_numbers = #tpu.dot_dimension_numbers<[1], [0], [0], [1], [0, 0, 1, 1], [], []>} : vector<64x8xbf16>, vector<8x16xbf16>, vector<64x16xf32> -> vector<64x16xf32>
    %54 = arith.addf %46, %53 : vector<64x16xf32>
    %c0_48 = arith.constant 0 : index
    %c1_49 = arith.constant 1 : index
    %c1_50 = arith.constant 1 : index
    %c0_51 = arith.constant 0 : index
    %55 = vector.load %arg3[%c0_48, %c1_49, %c1_50, %c0_51] : memref<1x10x10x8xf32, #tpu.memory_space<vmem>>, vector<1x8x8x8xf32>
    %56 = vector.shape_cast %55 : vector<1x8x8x8xf32> to vector<8x8x8xf32>
    %57 = vector.shape_cast %56 : vector<8x8x8xf32> to vector<64x8xf32>
    %58 = arith.truncf %57 : vector<64x8xf32> to vector<64x8xbf16>
    %c7 = arith.constant 7 : index
    %c0_52 = arith.constant 0 : index
    %c0_53 = arith.constant 0 : index
    %59 = vector.load %arg5[%c7, %c0_52, %c0_53] : memref<9x8x16xbf16, #tpu.memory_space<vmem>>, vector<1x8x16xbf16>
    %60 = vector.shape_cast %59 : vector<1x8x16xbf16> to vector<8x16xbf16>
    %cst_54 = arith.constant dense<0.000000e+00> : vector<64x16xf32>
    %61 = tpu.matmul %58, %60, %cst_54 {dimension_numbers = #tpu.dot_dimension_numbers<[1], [0], [0], [1], [0, 0, 1, 1], [], []>} : vector<64x8xbf16>, vector<8x16xbf16>, vector<64x16xf32> -> vector<64x16xf32>
    %62 = arith.addf %54, %61 : vector<64x16xf32>
    %c0_55 = arith.constant 0 : index
    %c1_56 = arith.constant 1 : index
    %c1_57 = arith.constant 1 : index
    %c0_58 = arith.constant 0 : index
    %63 = vector.load %arg4[%c0_55, %c1_56, %c1_57, %c0_58] : memref<1x10x10x8xf32, #tpu.memory_space<vmem>>, vector<1x8x8x8xf32>
    %64 = vector.shape_cast %63 : vector<1x8x8x8xf32> to vector<8x8x8xf32>
    %65 = vector.shape_cast %64 : vector<8x8x8xf32> to vector<64x8xf32>
    %66 = arith.truncf %65 : vector<64x8xf32> to vector<64x8xbf16>
    %c8 = arith.constant 8 : index
    %c0_59 = arith.constant 0 : index
    %c0_60 = arith.constant 0 : index
    %67 = vector.load %arg5[%c8, %c0_59, %c0_60] : memref<9x8x16xbf16, #tpu.memory_space<vmem>>, vector<1x8x16xbf16>
    %68 = vector.shape_cast %67 : vector<1x8x16xbf16> to vector<8x16xbf16>
    %cst_61 = arith.constant dense<0.000000e+00> : vector<64x16xf32>
    %69 = tpu.matmul %66, %68, %cst_61 {dimension_numbers = #tpu.dot_dimension_numbers<[1], [0], [0], [1], [0, 0, 1, 1], [], []>} : vector<64x8xbf16>, vector<8x16xbf16>, vector<64x16xf32> -> vector<64x16xf32>
    %70 = arith.addf %62, %69 : vector<64x16xf32>
    %c0_62 = arith.constant 0 : index
    %c0_63 = arith.constant 0 : index
    %71 = vector.load %arg6[%c0_62, %c0_63] : memref<1x16xf32, #tpu.memory_space<vmem>>, vector<1x16xf32>
    %72 = vector.broadcast %71 : vector<1x16xf32> to vector<64x16xf32>
    %73 = arith.addf %70, %72 : vector<64x16xf32>
    %cst_64 = arith.constant 0.000000e+00 : f32
    %74 = vector.broadcast %cst_64 : f32 to vector<64x16xf32>
    %75 = arith.maximumf %73, %74 : vector<64x16xf32>
    %cst_65 = arith.constant 0.000000e+00 : f32
    %76 = vector.broadcast %cst_65 : f32 to vector<10x10x16xf32>
    %c0_66 = arith.constant 0 : index
    %c0_67 = arith.constant 0 : index
    %c0_68 = arith.constant 0 : index
    %77 = vector.load %arg12[%c0_66, %c0_67, %c0_68] : memref<10x10x16xf32, #tpu.memory_space<vmem>>, vector<10x10x16xf32>
    tpu.vector_store %arg12[%c0_66, %c0_67, %c0_68], %76 {strides = array<i32>} : memref<10x10x16xf32, #tpu.memory_space<vmem>>, vector<10x10x16xf32>,
    %78 = vector.shape_cast %75 : vector<64x16xf32> to vector<8x8x16xf32>
    %c1_69 = arith.constant 1 : index
    %c1_70 = arith.constant 1 : index
    %c0_71 = arith.constant 0 : index
    %79 = vector.load %arg12[%c1_69, %c1_70, %c0_71] : memref<10x10x16xf32, #tpu.memory_space<vmem>>, vector<8x8x16xf32>
    tpu.vector_store %arg12[%c1_69, %c1_70, %c0_71], %78 {strides = array<i32>} : memref<10x10x16xf32, #tpu.memory_space<vmem>>, vector<8x8x16xf32>,
    %c0_72 = arith.constant 0 : index
    %c0_73 = arith.constant 0 : index
    %c0_74 = arith.constant 0 : index
    %80 = vector.load %arg12[%c0_72, %c0_73, %c0_74] : memref<10x10x16xf32, #tpu.memory_space<vmem>>, vector<8x8x16xf32>
    %81 = vector.shape_cast %80 : vector<8x8x16xf32> to vector<64x16xf32>
    %82 = arith.truncf %81 : vector<64x16xf32> to vector<64x16xbf16>
    %c0_75 = arith.constant 0 : index
    %c0_76 = arith.constant 0 : index
    %c0_77 = arith.constant 0 : index
    %83 = vector.load %arg7[%c0_75, %c0_76, %c0_77] : memref<9x16x16xbf16, #tpu.memory_space<vmem>>, vector<1x16x16xbf16>
    %84 = vector.shape_cast %83 : vector<1x16x16xbf16> to vector<16x16xbf16>
    %cst_78 = arith.constant dense<0.000000e+00> : vector<64x16xf32>
    %85 = tpu.matmul %82, %84, %cst_78 {dimension_numbers = #tpu.dot_dimension_numbers<[1], [0], [0], [1], [0, 0, 1, 1], [], []>} : vector<64x16xbf16>, vector<16x16xbf16>, vector<64x16xf32> -> vector<64x16xf32>
    %c0_79 = arith.constant 0 : index
    %c1_80 = arith.constant 1 : index
    %c0_81 = arith.constant 0 : index
    %86 = vector.load %arg12[%c0_79, %c1_80, %c0_81] : memref<10x10x16xf32, #tpu.memory_space<vmem>>, vector<8x8x16xf32>
    %87 = vector.shape_cast %86 : vector<8x8x16xf32> to vector<64x16xf32>
    %88 = arith.truncf %87 : vector<64x16xf32> to vector<64x16xbf16>
    %c1_82 = arith.constant 1 : index
    %c0_83 = arith.constant 0 : index
    %c0_84 = arith.constant 0 : index
    %89 = vector.load %arg7[%c1_82, %c0_83, %c0_84] : memref<9x16x16xbf16, #tpu.memory_space<vmem>>, vector<1x16x16xbf16>
    %90 = vector.shape_cast %89 : vector<1x16x16xbf16> to vector<16x16xbf16>
    %cst_85 = arith.constant dense<0.000000e+00> : vector<64x16xf32>
    %91 = tpu.matmul %88, %90, %cst_85 {dimension_numbers = #tpu.dot_dimension_numbers<[1], [0], [0], [1], [0, 0, 1, 1], [], []>} : vector<64x16xbf16>, vector<16x16xbf16>, vector<64x16xf32> -> vector<64x16xf32>
    %92 = arith.addf %85, %91 : vector<64x16xf32>
    %c0_86 = arith.constant 0 : index
    %c2_87 = arith.constant 2 : index
    %c0_88 = arith.constant 0 : index
    %93 = vector.load %arg12[%c0_86, %c2_87, %c0_88] : memref<10x10x16xf32, #tpu.memory_space<vmem>>, vector<8x8x16xf32>
    %94 = vector.shape_cast %93 : vector<8x8x16xf32> to vector<64x16xf32>
    %95 = arith.truncf %94 : vector<64x16xf32> to vector<64x16xbf16>
    %c2_89 = arith.constant 2 : index
    %c0_90 = arith.constant 0 : index
    %c0_91 = arith.constant 0 : index
    %96 = vector.load %arg7[%c2_89, %c0_90, %c0_91] : memref<9x16x16xbf16, #tpu.memory_space<vmem>>, vector<1x16x16xbf16>
    %97 = vector.shape_cast %96 : vector<1x16x16xbf16> to vector<16x16xbf16>
    %cst_92 = arith.constant dense<0.000000e+00> : vector<64x16xf32>
    %98 = tpu.matmul %95, %97, %cst_92 {dimension_numbers = #tpu.dot_dimension_numbers<[1], [0], [0], [1], [0, 0, 1, 1], [], []>} : vector<64x16xbf16>, vector<16x16xbf16>, vector<64x16xf32> -> vector<64x16xf32>
    %99 = arith.addf %92, %98 : vector<64x16xf32>
    %c1_93 = arith.constant 1 : index
    %c0_94 = arith.constant 0 : index
    %c0_95 = arith.constant 0 : index
    %100 = vector.load %arg12[%c1_93, %c0_94, %c0_95] : memref<10x10x16xf32, #tpu.memory_space<vmem>>, vector<8x8x16xf32>
    %101 = vector.shape_cast %100 : vector<8x8x16xf32> to vector<64x16xf32>
    %102 = arith.truncf %101 : vector<64x16xf32> to vector<64x16xbf16>
    %c3_96 = arith.constant 3 : index
    %c0_97 = arith.constant 0 : index
    %c0_98 = arith.constant 0 : index
    %103 = vector.load %arg7[%c3_96, %c0_97, %c0_98] : memref<9x16x16xbf16, #tpu.memory_space<vmem>>, vector<1x16x16xbf16>
    %104 = vector.shape_cast %103 : vector<1x16x16xbf16> to vector<16x16xbf16>
    %cst_99 = arith.constant dense<0.000000e+00> : vector<64x16xf32>
    %105 = tpu.matmul %102, %104, %cst_99 {dimension_numbers = #tpu.dot_dimension_numbers<[1], [0], [0], [1], [0, 0, 1, 1], [], []>} : vector<64x16xbf16>, vector<16x16xbf16>, vector<64x16xf32> -> vector<64x16xf32>
    %106 = arith.addf %99, %105 : vector<64x16xf32>
    %c1_100 = arith.constant 1 : index
    %c1_101 = arith.constant 1 : index
    %c0_102 = arith.constant 0 : index
    %107 = vector.load %arg12[%c1_100, %c1_101, %c0_102] : memref<10x10x16xf32, #tpu.memory_space<vmem>>, vector<8x8x16xf32>
    %108 = vector.shape_cast %107 : vector<8x8x16xf32> to vector<64x16xf32>
    %109 = arith.truncf %108 : vector<64x16xf32> to vector<64x16xbf16>
    %c4_103 = arith.constant 4 : index
    %c0_104 = arith.constant 0 : index
    %c0_105 = arith.constant 0 : index
    %110 = vector.load %arg7[%c4_103, %c0_104, %c0_105] : memref<9x16x16xbf16, #tpu.memory_space<vmem>>, vector<1x16x16xbf16>
    %111 = vector.shape_cast %110 : vector<1x16x16xbf16> to vector<16x16xbf16>
    %cst_106 = arith.constant dense<0.000000e+00> : vector<64x16xf32>
    %112 = tpu.matmul %109, %111, %cst_106 {dimension_numbers = #tpu.dot_dimension_numbers<[1], [0], [0], [1], [0, 0, 1, 1], [], []>} : vector<64x16xbf16>, vector<16x16xbf16>, vector<64x16xf32> -> vector<64x16xf32>
    %113 = arith.addf %106, %112 : vector<64x16xf32>
    %c1_107 = arith.constant 1 : index
    %c2_108 = arith.constant 2 : index
    %c0_109 = arith.constant 0 : index
    %114 = vector.load %arg12[%c1_107, %c2_108, %c0_109] : memref<10x10x16xf32, #tpu.memory_space<vmem>>, vector<8x8x16xf32>
    %115 = vector.shape_cast %114 : vector<8x8x16xf32> to vector<64x16xf32>
    %116 = arith.truncf %115 : vector<64x16xf32> to vector<64x16xbf16>
    %c5_110 = arith.constant 5 : index
    %c0_111 = arith.constant 0 : index
    %c0_112 = arith.constant 0 : index
    %117 = vector.load %arg7[%c5_110, %c0_111, %c0_112] : memref<9x16x16xbf16, #tpu.memory_space<vmem>>, vector<1x16x16xbf16>
    %118 = vector.shape_cast %117 : vector<1x16x16xbf16> to vector<16x16xbf16>
    %cst_113 = arith.constant dense<0.000000e+00> : vector<64x16xf32>
    %119 = tpu.matmul %116, %118, %cst_113 {dimension_numbers = #tpu.dot_dimension_numbers<[1], [0], [0], [1], [0, 0, 1, 1], [], []>} : vector<64x16xbf16>, vector<16x16xbf16>, vector<64x16xf32> -> vector<64x16xf32>
    %120 = arith.addf %113, %119 : vector<64x16xf32>
    %c2_114 = arith.constant 2 : index
    %c0_115 = arith.constant 0 : index
    %c0_116 = arith.constant 0 : index
    %121 = vector.load %arg12[%c2_114, %c0_115, %c0_116] : memref<10x10x16xf32, #tpu.memory_space<vmem>>, vector<8x8x16xf32>
    %122 = vector.shape_cast %121 : vector<8x8x16xf32> to vector<64x16xf32>
    %123 = arith.truncf %122 : vector<64x16xf32> to vector<64x16xbf16>
    %c6_117 = arith.constant 6 : index
    %c0_118 = arith.constant 0 : index
    %c0_119 = arith.constant 0 : index
    %124 = vector.load %arg7[%c6_117, %c0_118, %c0_119] : memref<9x16x16xbf16, #tpu.memory_space<vmem>>, vector<1x16x16xbf16>
    %125 = vector.shape_cast %124 : vector<1x16x16xbf16> to vector<16x16xbf16>
    %cst_120 = arith.constant dense<0.000000e+00> : vector<64x16xf32>
    %126 = tpu.matmul %123, %125, %cst_120 {dimension_numbers = #tpu.dot_dimension_numbers<[1], [0], [0], [1], [0, 0, 1, 1], [], []>} : vector<64x16xbf16>, vector<16x16xbf16>, vector<64x16xf32> -> vector<64x16xf32>
    %127 = arith.addf %120, %126 : vector<64x16xf32>
    %c2_121 = arith.constant 2 : index
    %c1_122 = arith.constant 1 : index
    %c0_123 = arith.constant 0 : index
    %128 = vector.load %arg12[%c2_121, %c1_122, %c0_123] : memref<10x10x16xf32, #tpu.memory_space<vmem>>, vector<8x8x16xf32>
    %129 = vector.shape_cast %128 : vector<8x8x16xf32> to vector<64x16xf32>
    %130 = arith.truncf %129 : vector<64x16xf32> to vector<64x16xbf16>
    %c7_124 = arith.constant 7 : index
    %c0_125 = arith.constant 0 : index
    %c0_126 = arith.constant 0 : index
    %131 = vector.load %arg7[%c7_124, %c0_125, %c0_126] : memref<9x16x16xbf16, #tpu.memory_space<vmem>>, vector<1x16x16xbf16>
    %132 = vector.shape_cast %131 : vector<1x16x16xbf16> to vector<16x16xbf16>
    %cst_127 = arith.constant dense<0.000000e+00> : vector<64x16xf32>
    %133 = tpu.matmul %130, %132, %cst_127 {dimension_numbers = #tpu.dot_dimension_numbers<[1], [0], [0], [1], [0, 0, 1, 1], [], []>} : vector<64x16xbf16>, vector<16x16xbf16>, vector<64x16xf32> -> vector<64x16xf32>
    %134 = arith.addf %127, %133 : vector<64x16xf32>
    %c2_128 = arith.constant 2 : index
    %c2_129 = arith.constant 2 : index
    %c0_130 = arith.constant 0 : index
    %135 = vector.load %arg12[%c2_128, %c2_129, %c0_130] : memref<10x10x16xf32, #tpu.memory_space<vmem>>, vector<8x8x16xf32>
    %136 = vector.shape_cast %135 : vector<8x8x16xf32> to vector<64x16xf32>
    %137 = arith.truncf %136 : vector<64x16xf32> to vector<64x16xbf16>
    %c8_131 = arith.constant 8 : index
    %c0_132 = arith.constant 0 : index
    %c0_133 = arith.constant 0 : index
    %138 = vector.load %arg7[%c8_131, %c0_132, %c0_133] : memref<9x16x16xbf16, #tpu.memory_space<vmem>>, vector<1x16x16xbf16>
    %139 = vector.shape_cast %138 : vector<1x16x16xbf16> to vector<16x16xbf16>
    %cst_134 = arith.constant dense<0.000000e+00> : vector<64x16xf32>
    %140 = tpu.matmul %137, %139, %cst_134 {dimension_numbers = #tpu.dot_dimension_numbers<[1], [0], [0], [1], [0, 0, 1, 1], [], []>} : vector<64x16xbf16>, vector<16x16xbf16>, vector<64x16xf32> -> vector<64x16xf32>
    %141 = arith.addf %134, %140 : vector<64x16xf32>
    %c0_135 = arith.constant 0 : index
    %c0_136 = arith.constant 0 : index
    %142 = vector.load %arg8[%c0_135, %c0_136] : memref<1x16xf32, #tpu.memory_space<vmem>>, vector<1x16xf32>
    %143 = vector.broadcast %142 : vector<1x16xf32> to vector<64x16xf32>
    %144 = arith.addf %141, %143 : vector<64x16xf32>
    %c0_137 = arith.constant 0 : index
    %c1_138 = arith.constant 1 : index
    %c1_139 = arith.constant 1 : index
    %c0_140 = arith.constant 0 : index
    %145 = vector.load %arg1[%c0_137, %c1_138, %c1_139, %c0_140] : memref<1x10x10x8xf32, #tpu.memory_space<vmem>>, vector<1x8x8x8xf32>
    %146 = vector.shape_cast %145 : vector<1x8x8x8xf32> to vector<8x8x8xf32>
    %147 = vector.shape_cast %146 : vector<8x8x8xf32> to vector<64x8xf32>
    %148 = arith.truncf %147 : vector<64x8xf32> to vector<64x8xbf16>
    %c0_141 = arith.constant 0 : index
    %c0_142 = arith.constant 0 : index
    %149 = vector.load %arg9[%c0_141, %c0_142] : memref<8x16xbf16, #tpu.memory_space<vmem>>, vector<8x16xbf16>
    %cst_143 = arith.constant dense<0.000000e+00> : vector<64x16xf32>
    %150 = tpu.matmul %148, %149, %cst_143 {dimension_numbers = #tpu.dot_dimension_numbers<[1], [0], [0], [1], [0, 0, 1, 1], [], []>} : vector<64x8xbf16>, vector<8x16xbf16>, vector<64x16xf32> -> vector<64x16xf32>
    %c0_144 = arith.constant 0 : index
    %c0_145 = arith.constant 0 : index
    %151 = vector.load %arg10[%c0_144, %c0_145] : memref<1x16xf32, #tpu.memory_space<vmem>>, vector<1x16xf32>
    %152 = vector.broadcast %151 : vector<1x16xf32> to vector<64x16xf32>
    %153 = arith.addf %150, %152 : vector<64x16xf32>
    %154 = arith.addf %144, %153 : vector<64x16xf32>
    %cst_146 = arith.constant 0.000000e+00 : f32
    %155 = vector.broadcast %cst_146 : f32 to vector<64x16xf32>
    %156 = arith.maximumf %154, %155 : vector<64x16xf32>
    %c0_147 = arith.constant 0 : index
    %c0_148 = arith.constant 0 : index
    %c0_149 = arith.constant 0 : index
    %157 = vector.load %arg11[%c0_147, %c0_148, %c0_149] : memref<1x64x16xf32, #tpu.memory_space<vmem>>, vector<1x64x16xf32>
    %158 = vector.shape_cast %157 : vector<1x64x16xf32> to vector<64x16xf32>
    %159 = vector.shape_cast %156 : vector<64x16xf32> to vector<1x64x16xf32>
    tpu.vector_store %arg11[%c0_147, %c0_148, %c0_149], %159 {strides = array<i32>} : memref<1x64x16xf32, #tpu.memory_space<vmem>>, vector<1x64x16xf32>,
    return
  }
  func.func @transform_0(%arg0: i32) -> (i32, i32, i32, i32) {
    %c0_i32 = arith.constant 0 : i32
    %c0_i32_0 = arith.constant 0 : i32
    %c0_i32_1 = arith.constant 0 : i32
    %c0_i32_2 = arith.constant 0 : i32
    return %arg0, %c0_i32, %c0_i32_0, %c0_i32_1 : i32, i32, i32, i32
  }
  func.func @transform_1(%arg0: i32) -> (i32, i32, i32, i32) {
    %c0_i32 = arith.constant 0 : i32
    %c0_i32_0 = arith.constant 0 : i32
    %c0_i32_1 = arith.constant 0 : i32
    %c0_i32_2 = arith.constant 0 : i32
    return %arg0, %c0_i32, %c0_i32_0, %c0_i32_1 : i32, i32, i32, i32
  }
  func.func @transform_2(%arg0: i32) -> (i32, i32, i32, i32) {
    %c0_i32 = arith.constant 0 : i32
    %c0_i32_0 = arith.constant 0 : i32
    %c0_i32_1 = arith.constant 0 : i32
    %c0_i32_2 = arith.constant 0 : i32
    return %arg0, %c0_i32, %c0_i32_0, %c0_i32_1 : i32, i32, i32, i32
  }
  func.func @transform_3(%arg0: i32) -> (i32, i32, i32, i32) {
    %c0_i32 = arith.constant 0 : i32
    %c0_i32_0 = arith.constant 0 : i32
    %c0_i32_1 = arith.constant 0 : i32
    %c0_i32_2 = arith.constant 0 : i32
    return %arg0, %c0_i32, %c0_i32_0, %c0_i32_1 : i32, i32, i32, i32
  }
  func.func @transform_4(%arg0: i32) -> (i32, i32, i32) {
    %c0_i32 = arith.constant 0 : i32
    %c0_i32_0 = arith.constant 0 : i32
    %c0_i32_1 = arith.constant 0 : i32
    %c0_i32_2 = arith.constant 0 : i32
    return %c0_i32, %c0_i32_0, %c0_i32_1 : i32, i32, i32
  }
  func.func @transform_5(%arg0: i32) -> (i32, i32) {
    %c0_i32 = arith.constant 0 : i32
    %c0_i32_0 = arith.constant 0 : i32
    %c0_i32_1 = arith.constant 0 : i32
    return %c0_i32, %c0_i32_0 : i32, i32
  }
  func.func @transform_6(%arg0: i32) -> (i32, i32, i32) {
    %c0_i32 = arith.constant 0 : i32
    %c0_i32_0 = arith.constant 0 : i32
    %c0_i32_1 = arith.constant 0 : i32
    %c0_i32_2 = arith.constant 0 : i32
    return %c0_i32, %c0_i32_0, %c0_i32_1 : i32, i32, i32
  }
  func.func @transform_7(%arg0: i32) -> (i32, i32) {
    %c0_i32 = arith.constant 0 : i32
    %c0_i32_0 = arith.constant 0 : i32
    %c0_i32_1 = arith.constant 0 : i32
    return %c0_i32, %c0_i32_0 : i32, i32
  }
  func.func @transform_8(%arg0: i32) -> (i32, i32) {
    %c0_i32 = arith.constant 0 : i32
    %c0_i32_0 = arith.constant 0 : i32
    %c0_i32_1 = arith.constant 0 : i32
    return %c0_i32, %c0_i32_0 : i32, i32
  }
  func.func @transform_9(%arg0: i32) -> (i32, i32) {
    %c0_i32 = arith.constant 0 : i32
    %c0_i32_0 = arith.constant 0 : i32
    %c0_i32_1 = arith.constant 0 : i32
    return %c0_i32, %c0_i32_0 : i32, i32
  }
  func.func @transform_10(%arg0: i32) -> (i32, i32, i32) {
    %c0_i32 = arith.constant 0 : i32
    %c0_i32_0 = arith.constant 0 : i32
    %c0_i32_1 = arith.constant 0 : i32
    return %arg0, %c0_i32, %c0_i32_0 : i32, i32, i32
  }
}

</mosaic_0001>

<llo_original>
// kernel: tpu_custom_call.1
$region0: #{tpu_custom_call.1}
  #allocation0 [shape = 'u32[]', space=smem, size = 0x4, offset = 0x4, fixed_abs, tag = 'smem constant byte address 0x4 - core index']
  #allocation1 [shape = 'u32[144,128]{1,0:T(1,128)}', space=vmem, size = 0x12000, scoped, tag = 'internal scratch']
  #allocation2 [shape = 'f32[10,10,16]{2,1,0:T(8,128)}', space=vmem, size = 0x14000, scoped, tag = 'scratch operand']
  %s0 = inlined_call_operand.vmem [shape: f32[2,10,10,8], index: 0, kind: input, shape index: {}]
  %s1 = inlined_call_operand.vmem [shape: f32[2,10,10,8], index: 1, kind: input, shape index: {}]
  %s2 = inlined_call_operand.vmem [shape: f32[2,10,10,8], index: 2, kind: input, shape index: {}]
  %s3 = inlined_call_operand.vmem [shape: f32[2,10,10,8], index: 3, kind: input, shape index: {}]
  %s4 = inlined_call_operand.vmem [shape: bf16[9,8,16], index: 4, kind: input, shape index: {}]
  %s5 = inlined_call_operand.vmem [shape: f32[1,16], index: 5, kind: input, shape index: {}]
  %s6 = inlined_call_operand.vmem [shape: bf16[9,16,16], index: 6, kind: input, shape index: {}]
  %s7 = inlined_call_operand.vmem [shape: f32[1,16], index: 7, kind: input, shape index: {}]
  %s8 = inlined_call_operand.vmem [shape: bf16[8,16], index: 8, kind: input, shape index: {}]
  %s9 = inlined_call_operand.vmem [shape: f32[1,16], index: 9, kind: input, shape index: {}]
  %s10 = inlined_call_operand.vmem [shape: f32[2,64,16], index: 10, kind: output, shape index: {}]
  %s11 = sld [smem:[#allocation0]]
  $region73: #{tpu_custom_call.1} parent=0
    _
  %s13 = ssub.s32 1, %s11
  %s14 = scalar_select 0, %s13, %s11
  loop: start=0, step=1, limit=4
  $region2: #{tpu_custom_call.1} parent=0 // loop_pre_header
    _
  $region3: #{tpu_custom_call.1} parent=0 // loop_header
    %s16 = sphi 0, %s20
    %p17 = scmp.ge.s32.totalorder %s16, 4
    %s26 = sphi 0, %s28
    %s29 = sphi 0, %s26
    %s30 = sphi 0, %s29
    %s46 = sphi 0, %s30
    %s52 = sphi 0, %s54
    %s55 = sphi 0, %s52
    %s56 = sphi 0, %s55
    %s72 = sphi 0, %s56
    %s78 = sphi 0, %s80
    %s81 = sphi 0, %s78
    %s82 = sphi 0, %s81
    %s98 = sphi 0, %s82
    %s104 = sphi 0, %s106
    %s107 = sphi 0, %s104
    %s108 = sphi 0, %s107
    %s124 = sphi 0, %s108
    %s128 = sphi 0, %s128
    %s130 = sphi 0, %s128
    %s131 = sphi 0, %s130
    %s145 = sphi 0, %s131
    %s149 = sphi 0, %s149
    %s151 = sphi 0, %s149
    %s152 = sphi 0, %s151
    %s166 = sphi 0, %s152
    %s170 = sphi 0, %s170
    %s172 = sphi 0, %s170
    %s173 = sphi 0, %s172
    %s187 = sphi 0, %s173
    %s191 = sphi 0, %s191
    %s193 = sphi 0, %s191
    %s194 = sphi 0, %s193
    %s208 = sphi 0, %s194
    %s212 = sphi 0, %s212
    %s214 = sphi 0, %s212
    %s215 = sphi 0, %s214
    %s229 = sphi 0, %s215
    %s233 = sphi 0, %s233
    %s235 = sphi 0, %s233
    %s236 = sphi 0, %s235
    %s250 = sphi 0, %s236
    %s256 = sphi 0, %s258
    %s259 = sphi 0, %s256
    %s260 = sphi 0, %s259
    %s276 = sphi 0, %s260
  $region4: #{tpu_custom_call.1} parent=0 // loop_header_branch
    %19 = sbr.rel (%p17) target = $region8
  $region5: #{tpu_custom_call.1} parent=0 // loop_body
    %s21 = ssub.s32 %s16, 1
    %s22 = ssub.s32 %s16, 2
    %s23 = sadd.s32 %s16, 1
    %s24 = ssub.s32 %s16, %s23
    %p25 = scmp.eq.s32.totalorder %s24, 0
    %s27 = sadd.s32 %s26, 1
    %s28 = scalar_select %p25, %s26, %s27
    %p31 = pneg %p25
    %p32 = scmp.eq.s32.totalorder %s16, 1
    %p33 = por %p31, %p32
    %p34 = scmp.ne.s32.totalorder %s26, %s29
    %p35 = scmp.eq.s32.totalorder %s16, 0
    %p36 = por %p34, %p35
    %p37 = scmp.ne.s32.totalorder %s26, %s29
    %p38 = scmp.eq.s32.totalorder %s21, 1
    %p39 = por %p37, %p38
    %p40 = scmp.ne.s32.totalorder %s29, %s30
    %p41 = scmp.eq.s32.totalorder %s21, 0
    %p42 = por %p40, %p41
    %p43 = scmp.ne.s32.totalorder %s29, %s30
    %p44 = scmp.eq.s32.totalorder %s22, 1
    %p45 = por %p43, %p44
    %p47 = scmp.ne.s32.totalorder %s30, %s46
    %p48 = scmp.eq.s32.totalorder %s22, 0
    %p49 = por %p47, %p48
    %s50 = ssub.s32 %s16, %s23
    %p51 = scmp.eq.s32.totalorder %s50, 0
    %s53 = sadd.s32 %s52, 1
    %s54 = scalar_select %p51, %s52, %s53
    %p57 = pneg %p51
    %p58 = scmp.eq.s32.totalorder %s16, 1
    %p59 = por %p57, %p58
    %p60 = scmp.ne.s32.totalorder %s52, %s55
    %p61 = scmp.eq.s32.totalorder %s16, 0
    %p62 = por %p60, %p61
    %p63 = scmp.ne.s32.totalorder %s52, %s55
    %p64 = scmp.eq.s32.totalorder %s21, 1
    %p65 = por %p63, %p64
    %p66 = scmp.ne.s32.totalorder %s55, %s56
    %p67 = scmp.eq.s32.totalorder %s21, 0
    %p68 = por %p66, %p67
    %p69 = scmp.ne.s32.totalorder %s55, %s56
    %p70 = scmp.eq.s32.totalorder %s22, 1
    %p71 = por %p69, %p70
    %p73 = scmp.ne.s32.totalorder %s56, %s72
    %p74 = scmp.eq.s32.totalorder %s22, 0
    %p75 = por %p73, %p74
    %s76 = ssub.s32 %s16, %s23
    %p77 = scmp.eq.s32.totalorder %s76, 0
    %s79 = sadd.s32 %s78, 1
    %s80 = scalar_select %p77, %s78, %s79
    %p83 = pneg %p77
    %p84 = scmp.eq.s32.totalorder %s16, 1
    %p85 = por %p83, %p84
    %p86 = scmp.ne.s32.totalorder %s78, %s81
    %p87 = scmp.eq.s32.totalorder %s16, 0
    %p88 = por %p86, %p87
    %p89 = scmp.ne.s32.totalorder %s78, %s81
    %p90 = scmp.eq.s32.totalorder %s21, 1
    %p91 = por %p89, %p90
    %p92 = scmp.ne.s32.totalorder %s81, %s82
    %p93 = scmp.eq.s32.totalorder %s21, 0
    %p94 = por %p92, %p93
    %p95 = scmp.ne.s32.totalorder %s81, %s82
    %p96 = scmp.eq.s32.totalorder %s22, 1
    %p97 = por %p95, %p96
    %p99 = scmp.ne.s32.totalorder %s82, %s98
    %p100 = scmp.eq.s32.totalorder %s22, 0
    %p101 = por %p99, %p100
    %s102 = ssub.s32 %s16, %s23
    %p103 = scmp.eq.s32.totalorder %s102, 0
    %s105 = sadd.s32 %s104, 1
    %s106 = scalar_select %p103, %s104, %s105
    %p109 = pneg %p103
    %p110 = scmp.eq.s32.totalorder %s16, 1
    %p111 = por %p109, %p110
    %p112 = scmp.ne.s32.totalorder %s104, %s107
    %p113 = scmp.eq.s32.totalorder %s16, 0
    %p114 = por %p112, %p113
    %p115 = scmp.ne.s32.totalorder %s104, %s107
    %p116 = scmp.eq.s32.totalorder %s21, 1
    %p117 = por %p115, %p116
    %p118 = scmp.ne.s32.totalorder %s107, %s108
    %p119 = scmp.eq.s32.totalorder %s21, 0
    %p120 = por %p118, %p119
    %p121 = scmp.ne.s32.totalorder %s107, %s108
    %p122 = scmp.eq.s32.totalorder %s22, 1
    %p123 = por %p121, %p122
    %p125 = scmp.ne.s32.totalorder %s108, %s124
    %p126 = scmp.eq.s32.totalorder %s22, 0
    %p127 = por %p125, %p126
    %s129 = sadd.s32 %s128, 1
    %p132 = scmp.eq.s32.totalorder %s16, 1
    %p133 = scmp.ne.s32.totalorder %s128, %s130
    %p134 = scmp.eq.s32.totalorder %s16, 0
    %p135 = por %p133, %p134
    %p136 = scmp.ne.s32.totalorder %s128, %s130
    %p137 = scmp.eq.s32.totalorder %s21, 1
    %p138 = por %p136, %p137
    %p139 = scmp.ne.s32.totalorder %s130, %s131
    %p140 = scmp.eq.s32.totalorder %s21, 0
    %p141 = por %p139, %p140
    %p142 = scmp.ne.s32.totalorder %s130, %s131
    %p143 = scmp.eq.s32.totalorder %s22, 1
    %p144 = por %p142, %p143
    %p146 = scmp.ne.s32.totalorder %s131, %s145
    %p147 = scmp.eq.s32.totalorder %s22, 0
    %p148 = por %p146, %p147
    %s150 = sadd.s32 %s149, 1
    %p153 = scmp.eq.s32.totalorder %s16, 1
    %p154 = scmp.ne.s32.totalorder %s149, %s151
    %p155 = scmp.eq.s32.totalorder %s16, 0
    %p156 = por %p154, %p155
    %p157 = scmp.ne.s32.totalorder %s149, %s151
    %p158 = scmp.eq.s32.totalorder %s21, 1
    %p159 = por %p157, %p158
    %p160 = scmp.ne.s32.totalorder %s151, %s152
    %p161 = scmp.eq.s32.totalorder %s21, 0
    %p162 = por %p160, %p161
    %p163 = scmp.ne.s32.totalorder %s151, %s152
    %p164 = scmp.eq.s32.totalorder %s22, 1
    %p165 = por %p163, %p164
    %p167 = scmp.ne.s32.totalorder %s152, %s166
    %p168 = scmp.eq.s32.totalorder %s22, 0
    %p169 = por %p167, %p168
    %s171 = sadd.s32 %s170, 1
    %p174 = scmp.eq.s32.totalorder %s16, 1
    %p175 = scmp.ne.s32.totalorder %s170, %s172
    %p176 = scmp.eq.s32.totalorder %s16, 0
    %p177 = por %p175, %p176
    %p178 = scmp.ne.s32.totalorder %s170, %s172
    %p179 = scmp.eq.s32.totalorder %s21, 1
    %p180 = por %p178, %p179
    %p181 = scmp.ne.s32.totalorder %s172, %s173
    %p182 = scmp.eq.s32.totalorder %s21, 0
    %p183 = por %p181, %p182
    %p184 = scmp.ne.s32.totalorder %s172, %s173
    %p185 = scmp.eq.s32.totalorder %s22, 1
    %p186 = por %p184, %p185
    %p188 = scmp.ne.s32.totalorder %s173, %s187
    %p189 = scmp.eq.s32.totalorder %s22, 0
    %p190 = por %p188, %p189
    %s192 = sadd.s32 %s191, 1
    %p195 = scmp.eq.s32.totalorder %s16, 1
    %p196 = scmp.ne.s32.totalorder %s191, %s193
    %p197 = scmp.eq.s32.totalorder %s16, 0
    %p198 = por %p196, %p197
    %p199 = scmp.ne.s32.totalorder %s191, %s193
    %p200 = scmp.eq.s32.totalorder %s21, 1
    %p201 = por %p199, %p200
    %p202 = scmp.ne.s32.totalorder %s193, %s194
    %p203 = scmp.eq.s32.totalorder %s21, 0
    %p204 = por %p202, %p203
    %p205 = scmp.ne.s32.totalorder %s193, %s194
    %p206 = scmp.eq.s32.totalorder %s22, 1
    %p207 = por %p205, %p206
    %p209 = scmp.ne.s32.totalorder %s194, %s208
    %p210 = scmp.eq.s32.totalorder %s22, 0
    %p211 = por %p209, %p210
    %s213 = sadd.s32 %s212, 1
    %p216 = scmp.eq.s32.totalorder %s16, 1
    %p217 = scmp.ne.s32.totalorder %s212, %s214
    %p218 = scmp.eq.s32.totalorder %s16, 0
    %p219 = por %p217, %p218
    %p220 = scmp.ne.s32.totalorder %s212, %s214
    %p221 = scmp.eq.s32.totalorder %s21, 1
    %p222 = por %p220, %p221
    %p223 = scmp.ne.s32.totalorder %s214, %s215
    %p224 = scmp.eq.s32.totalorder %s21, 0
    %p225 = por %p223, %p224
    %p226 = scmp.ne.s32.totalorder %s214, %s215
    %p227 = scmp.eq.s32.totalorder %s22, 1
    %p228 = por %p226, %p227
    %p230 = scmp.ne.s32.totalorder %s215, %s229
    %p231 = scmp.eq.s32.totalorder %s22, 0
    %p232 = por %p230, %p231
    %s234 = sadd.s32 %s233, 1
    %p237 = scmp.eq.s32.totalorder %s16, 1
    %p238 = scmp.ne.s32.totalorder %s233, %s235
    %p239 = scmp.eq.s32.totalorder %s16, 0
    %p240 = por %p238, %p239
    %p241 = scmp.ne.s32.totalorder %s233, %s235
    %p242 = scmp.eq.s32.totalorder %s21, 1
    %p243 = por %p241, %p242
    %p244 = scmp.ne.s32.totalorder %s235, %s236
    %p245 = scmp.eq.s32.totalorder %s21, 0
    %p246 = por %p244, %p245
    %p247 = scmp.ne.s32.totalorder %s235, %s236
    %p248 = scmp.eq.s32.totalorder %s22, 1
    %p249 = por %p247, %p248
    %p251 = scmp.ne.s32.totalorder %s236, %s250
    %p252 = scmp.eq.s32.totalorder %s22, 0
    %p253 = por %p251, %p252
    %s254 = ssub.s32 %s16, %s23
    %p255 = scmp.eq.s32.totalorder %s254, 0
    %s257 = sadd.s32 %s256, 1
    %s258 = scalar_select %p255, %s256, %s257
    %p261 = pneg %p255
    %p262 = scmp.eq.s32.totalorder %s16, 1
    %p263 = por %p261, %p262
    %p264 = scmp.ne.s32.totalorder %s256, %s259
    %p265 = scmp.eq.s32.totalorder %s16, 0
    %p266 = por %p264, %p265
    %p267 = scmp.ne.s32.totalorder %s256, %s259
    %p268 = scmp.eq.s32.totalorder %s21, 1
    %p269 = por %p267, %p268
    %p270 = scmp.ne.s32.totalorder %s259, %s260
    %p271 = scmp.eq.s32.totalorder %s21, 0
    %p272 = por %p270, %p271
    %p273 = scmp.ne.s32.totalorder %s259, %s260
    %p274 = scmp.eq.s32.totalorder %s22, 1
    %p275 = por %p273, %p274
    %p277 = scmp.ne.s32.totalorder %s260, %s276
    %p278 = scmp.eq.s32.totalorder %s22, 0
    %p279 = por %p277, %p278
    %p280 = scmp.le.s32.totalorder 1, %s16
    %p281 = scmp.lt.s32.totalorder %s16, 3
    %p282 = pnand %p280, %p281
    %p283 = pneg %p282
    // Predicated region
    $region9: #{tpu_custom_call.1} parent=5 // pred_check
      _
    $region10: #{tpu_custom_call.1} parent=5 // pred_check_branch
      %285 = sbr.rel (%p282) target = $region12
    $region11: #{tpu_custom_call.1} parent=5 // pred_region
      %s286 = ssub.s32 %s16, 1
      // Predicated region
      $region13: #{tpu_custom_call.1} parent=11 // pred_check
        %p287 = pneg %p141
      $region14: #{tpu_custom_call.1} parent=11 // pred_check_branch
        %289 = sbr.rel (%p287) target = $region16
      $region15: #{tpu_custom_call.1} parent=11 // pred_region
        _
      $region16: #{tpu_custom_call.1} parent=11 // pred_fallthru
        _
      // Predicated region
      $region17: #{tpu_custom_call.1} parent=11 // pred_check
        %p290 = pneg %p162
      $region18: #{tpu_custom_call.1} parent=11 // pred_check_branch
        %292 = sbr.rel (%p290) target = $region20
      $region19: #{tpu_custom_call.1} parent=11 // pred_region
        _
      $region20: #{tpu_custom_call.1} parent=11 // pred_fallthru
        _
      // Predicated region
      $region21: #{tpu_custom_call.1} parent=11 // pred_check
        %p293 = pneg %p183
      $region22: #{tpu_custom_call.1} parent=11 // pred_check_branch
        %295 = sbr.rel (%p293) target = $region24
      $region23: #{tpu_custom_call.1} parent=11 // pred_region
        _
      $region24: #{tpu_custom_call.1} parent=11 // pred_fallthru
        _
      // Predicated region
      $region25: #{tpu_custom_call.1} parent=11 // pred_check
        %p296 = pneg %p204
      $region26: #{tpu_custom_call.1} parent=11 // pred_check_branch
        %298 = sbr.rel (%p296) target = $region28
      $region27: #{tpu_custom_call.1} parent=11 // pred_region
        _
      $region28: #{tpu_custom_call.1} parent=11 // pred_fallthru
        _
      // Predicated region
      $region29: #{tpu_custom_call.1} parent=11 // pred_check
        %p299 = pneg %p225
      $region30: #{tpu_custom_call.1} parent=11 // pred_check_branch
        %301 = sbr.rel (%p299) target = $region32
      $region31: #{tpu_custom_call.1} parent=11 // pred_region
        _
      $region32: #{tpu_custom_call.1} parent=11 // pred_fallthru
        _
      // Predicated region
      $region33: #{tpu_custom_call.1} parent=11 // pred_check
        %p302 = pneg %p246
      $region34: #{tpu_custom_call.1} parent=11 // pred_check_branch
        %304 = sbr.rel (%p302) target = $region36
      $region35: #{tpu_custom_call.1} parent=11 // pred_region
        _
      $region36: #{tpu_custom_call.1} parent=11 // pred_fallthru
        _
    $region12: #{tpu_custom_call.1} parent=5 // pred_fallthru
      _
    %p305 = scmp.lt.s32.totalorder %s16, 2
    // Predicated region
    $region37: #{tpu_custom_call.1} parent=5 // pred_check
      %p306 = pneg %p305
    $region38: #{tpu_custom_call.1} parent=5 // pred_check_branch
      %308 = sbr.rel (%p306) target = $region40
    $region39: #{tpu_custom_call.1} parent=5 // pred_region
      // Predicated region
      $region41: #{tpu_custom_call.1} parent=39 // pred_check
        %p309 = pneg %p36
      $region42: #{tpu_custom_call.1} parent=39 // pred_check_branch
        %311 = sbr.rel (%p309) target = $region44
      $region43: #{tpu_custom_call.1} parent=39 // pred_region
        %p312 = scmp.lt.s32.totalorder %s16, 1
        %s313 = scalar_select %p312, %s16, 1
        %s314 = smul.addr %s313, 20
        %s315 = smul.addr %s314, 8
        %s316 = scalar_lea.vmem %s0, %s315
      $region44: #{tpu_custom_call.1} parent=39 // pred_fallthru
        _
      // Predicated region
      $region45: #{tpu_custom_call.1} parent=39 // pred_check
        %p317 = pneg %p62
      $region46: #{tpu_custom_call.1} parent=39 // pred_check_branch
        %319 = sbr.rel (%p317) target = $region48
      $region47: #{tpu_custom_call.1} parent=39 // pred_region
        %p320 = scmp.lt.s32.totalorder %s16, 1
        %s321 = scalar_select %p320, %s16, 1
        %s322 = smul.addr %s321, 20
        %s323 = smul.addr %s322, 8
        %s324 = scalar_lea.vmem %s1, %s323
      $region48: #{tpu_custom_call.1} parent=39 // pred_fallthru
        _
      // Predicated region
      $region49: #{tpu_custom_call.1} parent=39 // pred_check
        %p325 = pneg %p88
      $region50: #{tpu_custom_call.1} parent=39 // pred_check_branch
        %327 = sbr.rel (%p325) target = $region52
      $region51: #{tpu_custom_call.1} parent=39 // pred_region
        %p328 = scmp.lt.s32.totalorder %s16, 1
        %s329 = scalar_select %p328, %s16, 1
        %s330 = smul.addr %s329, 20
        %s331 = smul.addr %s330, 8
        %s332 = scalar_lea.vmem %s2, %s331
      $region52: #{tpu_custom_call.1} parent=39 // pred_fallthru
        _
      // Predicated region
      $region53: #{tpu_custom_call.1} parent=39 // pred_check
        %p333 = pneg %p114
      $region54: #{tpu_custom_call.1} parent=39 // pred_check_branch
        %335 = sbr.rel (%p333) target = $region56
      $region55: #{tpu_custom_call.1} parent=39 // pred_region
        %p336 = scmp.lt.s32.totalorder %s16, 1
        %s337 = scalar_select %p336, %s16, 1
        %s338 = smul.addr %s337, 20
        %s339 = smul.addr %s338, 8
        %s340 = scalar_lea.vmem %s3, %s339
      $region56: #{tpu_custom_call.1} parent=39 // pred_fallthru
        _
    $region40: #{tpu_custom_call.1} parent=5 // pred_fallthru
      _
    %p341 = scmp.le.s32.totalorder 1, %s16
    %p342 = scmp.lt.s32.totalorder %s16, 3
    %p343 = pnand %p341, %p342
    %p344 = pneg %p343
    // Predicated region
    $region57: #{tpu_custom_call.1} parent=5 // pred_check
      _
    $region58: #{tpu_custom_call.1} parent=5 // pred_check_branch
      %346 = sbr.rel (%p343) target = $region60
    $region59: #{tpu_custom_call.1} parent=5 // pred_region
      %s347 = ssub.s32 %s16, 1
      %p348 = scmp.lt.s32.totalorder %s21, 1
      %s349 = scalar_select %p348, %s21, 1
      %s350 = smul.addr %s349, 20
      %s351 = smul.addr %s350, 8
      %s352 = scalar_lea.vmem %s0, %s351
      %p353 = pneg %p42
      %p354 = pneg %p39
      %p355 = scmp.lt.s32.totalorder %s21, 1
      %s356 = scalar_select %p355, %s21, 1
      %s357 = smul.addr %s356, 20
      %s358 = smul.addr %s357, 8
      %s359 = scalar_lea.vmem %s1, %s358
      %p360 = pneg %p68
      %p361 = pneg %p65
      %p362 = scmp.lt.s32.totalorder %s21, 1
      %s363 = scalar_select %p362, %s21, 1
      %s364 = smul.addr %s363, 20
      %s365 = smul.addr %s364, 8
      %s366 = scalar_lea.vmem %s2, %s365
      %p367 = pneg %p94
      %p368 = pneg %p91
      %p369 = scmp.lt.s32.totalorder %s21, 1
      %s370 = scalar_select %p369, %s21, 1
      %s371 = smul.addr %s370, 20
      %s372 = smul.addr %s371, 8
      %s373 = scalar_lea.vmem %s3, %s372
      %p374 = pneg %p120
      %p375 = pneg %p117
      %p376 = pneg %p141
      %p377 = pneg %p138
      %p378 = pneg %p162
      %p379 = pneg %p159
      %p380 = pneg %p183
      %p381 = pneg %p180
      %p382 = pneg %p204
      %p383 = pneg %p201
      %p384 = pneg %p225
      %p385 = pneg %p222
      %p386 = pneg %p246
      %p387 = pneg %p243
      %p388 = pneg %p272
      %p389 = pneg %p269
      %p390 = scmp.lt.s32.totalorder %s21, 1
      %s391 = scalar_select %p390, %s21, 1
      %s392 = smul.addr %s391, 8
      %s393 = smul.addr %s392, 8
      %s394 = scalar_lea.vmem %s10, %s393
      %p395 = scmp.lt.s32.totalorder %s21, 1
      %s396 = scalar_select %p395, %s21, 1
      %s397 = smul.addr %s396, 20
      %s398 = smul.addr %s397, 8
      %s399 = scalar_lea.vmem %s0, %s398
      %p400 = scmp.lt.s32.totalorder %s21, 1
      %s401 = scalar_select %p400, %s21, 1
      %s402 = smul.addr %s401, 20
      %s403 = smul.addr %s402, 8
      %s404 = scalar_lea.vmem %s1, %s403
      %p405 = scmp.lt.s32.totalorder %s21, 1
      %s406 = scalar_select %p405, %s21, 1
      %s407 = smul.addr %s406, 20
      %s408 = smul.addr %s407, 8
      %s409 = scalar_lea.vmem %s2, %s408
      %p410 = scmp.lt.s32.totalorder %s21, 1
      %s411 = scalar_select %p410, %s21, 1
      %s412 = smul.addr %s411, 20
      %s413 = smul.addr %s412, 8
      %s414 = scalar_lea.vmem %s3, %s413
      %p415 = scmp.lt.s32.totalorder %s21, 1
      %s416 = scalar_select %p415, %s21, 1
      %s417 = smul.addr %s416, 8
      %s418 = smul.addr %s417, 8
      %s419 = scalar_lea.vmem %s10, %s418
      %v421 = vld [vmem:[%s414] sm:$0xff]
      %v422 = vld [vmem:[%s414 + $0x10] sm:$0xff]
      %v423 = vld [vmem:[%s414 + $0x20] sm:$0xff]
      %v424 = vld [vmem:[%s414 + $0x30] sm:$0xff]
      %v425 = vld [vmem:[%s414 + $0x40] sm:$0xff]
      %v426 = vld [vmem:[%s414 + $0x50] sm:$0xff]
      %v427 = vld [vmem:[%s414 + $0x60] sm:$0xff]
      %v428 = vld [vmem:[%s414 + $0x70] sm:$0xff]
      %v429 = vpack.c.bf16 %v422, %v421
      %v430 = vpack.c.bf16 %v424, %v423
      %v431 = vpack.c.bf16 %v426, %v425
      %v432 = vpack.c.bf16 %v428, %v427
      %v433 = vld [vmem:[%s4] sm:$0xf]
      %v434 = vld [vmem:[%s409 + $0x1] sm:$0xff]
      %v435 = vld [vmem:[%s409 + $0x11] sm:$0xff]
      %v436 = vld [vmem:[%s409 + $0x21] sm:$0xff]
      %v437 = vld [vmem:[%s409 + $0x31] sm:$0xff]
      %v438 = vld [vmem:[%s409 + $0x41] sm:$0xff]
      %v439 = vld [vmem:[%s409 + $0x51] sm:$0xff]
      %v440 = vld [vmem:[%s409 + $0x61] sm:$0xff]
      %v441 = vld [vmem:[%s409 + $0x71] sm:$0xff]
      %v442 = vpack.c.bf16 %v435, %v434
      %v443 = vpack.c.bf16 %v437, %v436
      %v444 = vpack.c.bf16 %v439, %v438
      %v445 = vpack.c.bf16 %v441, %v440
      %s446 = scalar_lea.vmem %s4, 4
      %v447 = vld [vmem:[%s446] sm:$0xf]
      %vm448 = vcmask 64512
      %v450 = vsel %vm448, %v442, 0
      %v453 = vsel %vm448, %v443, 0
      %v456 = vsel %vm448, %v444, 0
      %v459 = vsel %vm448, %v445, 0
      %vm461 = vcmask 1043456
      %v463 = vsel %vm461, %v447, 0
      %465 = vmatprep.subr.bf16.mxu0 0
      %466 = vmatpush1.bf16.msra.mxu0 %v463
      %467 = vmatprep.subr.bf16.mxu0 0
      %468 = vmatpush1.bf16.msra.mxu0 0
      %469 = vmatprep.subr.bf16.mxu0 0
      %470 = vmatpush1.bf16.msra.mxu0 0
      %471 = vmatprep.subr.bf16.mxu0 0
      %472 = vmatpush1.bf16.msra.mxu0 0
      %473 = vmatprep.subr.bf16.mxu0 0
      %474 = vmatpush1.bf16.msra.mxu0 0
      %475 = vmatprep.subr.bf16.mxu0 0
      %476 = vmatpush1.bf16.msra.mxu0 0
      %477 = vmatprep.subr.bf16.mxu0 0
      %478 = vmatpush1.bf16.msra.mxu0 0
      %479 = vmatprep.subr.bf16.mxu0 0
      %480 = vmatpush1.bf16.msra.mxu0 0
      %481 = vmatprep.subr.bf16.mxu0 0
      %482 = vmatpush1.bf16.msra.mxu0 0
      %483 = vmatprep.subr.bf16.mxu0 0
      %484 = vmatpush1.bf16.msra.mxu0 0
      %485 = vmatprep.subr.bf16.mxu0 0
      %486 = vmatpush1.bf16.msra.mxu0 0
      %487 = vmatprep.subr.bf16.mxu0 0
      %488 = vmatpush1.bf16.msra.mxu0 0
      %489 = vmatprep.subr.bf16.mxu0 0
      %490 = vmatpush1.bf16.msra.mxu0 0
      %491 = vmatprep.subr.bf16.mxu0 0
      %492 = vmatpush1.bf16.msra.mxu0 0
      %493 = vmatprep.subr.bf16.mxu0 0
      %494 = vmatpush1.bf16.msra.mxu0 0
      %495 = vmatprep.subr.bf16.mxu0 0
      %496 = vmatpush1.bf16.msra.mxu0 0
      %497 = vmatprep.mubr.bf16.mxu0 0
      %498 = vmatmul.mubr.bf16.gmra.mrb[0].mxu0 %v450
      %v499 = vpop.f32.mrb[0].mxu0
      %v500 = vadd.f32 0.0, %v499
      %v501 = vpop.f32.mrb[0].mxu0
      %v502 = vpop.f32.mrb[0].mxu0
      %v503 = vadd.f32 0.0, %v502
      %v504 = vpop.f32.mrb[0].mxu0
      %505 = vmatprep.mubr.bf16.mxu0 0
      %506 = vmatmul.mubr.bf16.gmra.mrb[0].mxu0 %v453
      %v507 = vpop.f32.mrb[0].mxu0
      %v508 = vadd.f32 0.0, %v507
      %v509 = vpop.f32.mrb[0].mxu0
      %v510 = vpop.f32.mrb[0].mxu0
      %v511 = vadd.f32 0.0, %v510
      %v512 = vpop.f32.mrb[0].mxu0
      %513 = vmatprep.mubr.bf16.mxu0 0
      %514 = vmatmul.mubr.bf16.gmra.mrb[0].mxu0 %v456
      %v515 = vpop.f32.mrb[0].mxu0
      %v516 = vadd.f32 0.0, %v515
      %v517 = vpop.f32.mrb[0].mxu0
      %v518 = vpop.f32.mrb[0].mxu0
      %v519 = vadd.f32 0.0, %v518
      %v520 = vpop.f32.mrb[0].mxu0
      %521 = vmatprep.mubr.bf16.mxu0 0
      %522 = vmatmul.mubr.bf16.gmra.mrb[0].mxu0 %v459
      %v523 = vpop.f32.mrb[0].mxu0
      %v524 = vadd.f32 0.0, %v523
      %v525 = vpop.f32.mrb[0].mxu0
      %v526 = vpop.f32.mrb[0].mxu0
      %v527 = vadd.f32 0.0, %v526
      %v528 = vpop.f32.mrb[0].mxu0
      %529 = vdwg.mxu0
      %v531 = vsel %vm448, %v429, 0
      %v534 = vsel %vm448, %v430, 0
      %v537 = vsel %vm448, %v431, 0
      %v540 = vsel %vm448, %v432, 0
      %v543 = vsel %vm461, %v433, 0
      %545 = vmatprep.subr.bf16.mxu0 0
      %546 = vmatpush1.bf16.msra.mxu0 %v543
      %547 = vmatprep.subr.bf16.mxu0 0
      %548 = vmatpush1.bf16.msra.mxu0 0
      %549 = vmatprep.subr.bf16.mxu0 0
      %550 = vmatpush1.bf16.msra.mxu0 0
      %551 = vmatprep.subr.bf16.mxu0 0
      %552 = vmatpush1.bf16.msra.mxu0 0
      %553 = vmatprep.subr.bf16.mxu0 0
      %554 = vmatpush1.bf16.msra.mxu0 0
      %555 = vmatprep.subr.bf16.mxu0 0
      %556 = vmatpush1.bf16.msra.mxu0 0
      %557 = vmatprep.subr.bf16.mxu0 0
      %558 = vmatpush1.bf16.msra.mxu0 0
      %559 = vmatprep.subr.bf16.mxu0 0
      %560 = vmatpush1.bf16.msra.mxu0 0
      %561 = vmatprep.subr.bf16.mxu0 0
      %562 = vmatpush1.bf16.msra.mxu0 0
      %563 = vmatprep.subr.bf16.mxu0 0
      %564 = vmatpush1.bf16.msra.mxu0 0
      %565 = vmatprep.subr.bf16.mxu0 0
      %566 = vmatpush1.bf16.msra.mxu0 0
      %567 = vmatprep.subr.bf16.mxu0 0
      %568 = vmatpush1.bf16.msra.mxu0 0
      %569 = vmatprep.subr.bf16.mxu0 0
      %570 = vmatpush1.bf16.msra.mxu0 0
      %571 = vmatprep.subr.bf16.mxu0 0
      %572 = vmatpush1.bf16.msra.mxu0 0
      %573 = vmatprep.subr.bf16.mxu0 0
      %574 = vmatpush1.bf16.msra.mxu0 0
      %575 = vmatprep.subr.bf16.mxu0 0
      %576 = vmatpush1.bf16.msra.mxu0 0
      %577 = vmatprep.mubr.bf16.mxu0 0
      %578 = vmatmul.mubr.bf16.gmra.mrb[0].mxu0 %v531
      %v579 = vpop.f32.mrb[0].mxu0
      %v580 = vadd.f32 %v500, %v579
      %v581 = vpop.f32.mrb[0].mxu0
      %v582 = vpop.f32.mrb[0].mxu0
      %v583 = vadd.f32 %v503, %v582
      %v584 = vpop.f32.mrb[0].mxu0
      %585 = vmatprep.mubr.bf16.mxu0 0
      %586 = vmatmul.mubr.bf16.gmra.mrb[0].mxu0 %v534
      %v587 = vpop.f32.mrb[0].mxu0
      %v588 = vadd.f32 %v508, %v587
      %v589 = vpop.f32.mrb[0].mxu0
      %v590 = vpop.f32.mrb[0].mxu0
      %v591 = vadd.f32 %v511, %v590
      %v592 = vpop.f32.mrb[0].mxu0
      %593 = vmatprep.mubr.bf16.mxu0 0
      %594 = vmatmul.mubr.bf16.gmra.mrb[0].mxu0 %v537
      %v595 = vpop.f32.mrb[0].mxu0
      %v596 = vadd.f32 %v516, %v595
      %v597 = vpop.f32.mrb[0].mxu0
      %v598 = vpop.f32.mrb[0].mxu0
      %v599 = vadd.f32 %v519, %v598
      %v600 = vpop.f32.mrb[0].mxu0
      %601 = vmatprep.mubr.bf16.mxu0 0
      %602 = vmatmul.mubr.bf16.gmra.mrb[0].mxu0 %v540
      %v603 = vpop.f32.mrb[0].mxu0
      %v604 = vadd.f32 %v524, %v603
      %v605 = vpop.f32.mrb[0].mxu0
      %v606 = vpop.f32.mrb[0].mxu0
      %v607 = vadd.f32 %v527, %v606
      %v608 = vpop.f32.mrb[0].mxu0
      %609 = vdwg.mxu0
      %v610 = vld [vmem:[%s414 + $0x1] sm:$0xff]
      %v611 = vld [vmem:[%s414 + $0x11] sm:$0xff]
      %v612 = vld [vmem:[%s414 + $0x21] sm:$0xff]
      %v613 = vld [vmem:[%s414 + $0x31] sm:$0xff]
      %v614 = vld [vmem:[%s414 + $0x41] sm:$0xff]
      %v615 = vld [vmem:[%s414 + $0x51] sm:$0xff]
      %v616 = vld [vmem:[%s414 + $0x61] sm:$0xff]
      %v617 = vld [vmem:[%s414 + $0x71] sm:$0xff]
      %v618 = vpack.c.bf16 %v611, %v610
      %v619 = vpack.c.bf16 %v613, %v612
      %v620 = vpack.c.bf16 %v615, %v614
      %v621 = vpack.c.bf16 %v617, %v616
      %s622 = scalar_lea.vmem %s4, 8
      %v623 = vld [vmem:[%s622] sm:$0xf]
      %v625 = vsel %vm448, %v618, 0
      %v628 = vsel %vm448, %v619, 0
      %v631 = vsel %vm448, %v620, 0
      %v634 = vsel %vm448, %v621, 0
      %v637 = vsel %vm461, %v623, 0
      %639 = vmatprep.subr.bf16.mxu0 0
      %640 = vmatpush1.bf16.msra.mxu0 %v637
      %641 = vmatprep.subr.bf16.mxu0 0
      %642 = vmatpush1.bf16.msra.mxu0 0
      %643 = vmatprep.subr.bf16.mxu0 0
      %644 = vmatpush1.bf16.msra.mxu0 0
      %645 = vmatprep.subr.bf16.mxu0 0
      %646 = vmatpush1.bf16.msra.mxu0 0
      %647 = vmatprep.subr.bf16.mxu0 0
      %648 = vmatpush1.bf16.msra.mxu0 0
      %649 = vmatprep.subr.bf16.mxu0 0
      %650 = vmatpush1.bf16.msra.mxu0 0
      %651 = vmatprep.subr.bf16.mxu0 0
      %652 = vmatpush1.bf16.msra.mxu0 0
      %653 = vmatprep.subr.bf16.mxu0 0
      %654 = vmatpush1.bf16.msra.mxu0 0
      %655 = vmatprep.subr.bf16.mxu0 0
      %656 = vmatpush1.bf16.msra.mxu0 0
      %657 = vmatprep.subr.bf16.mxu0 0
      %658 = vmatpush1.bf16.msra.mxu0 0
      %659 = vmatprep.subr.bf16.mxu0 0
      %660 = vmatpush1.bf16.msra.mxu0 0
      %661 = vmatprep.subr.bf16.mxu0 0
      %662 = vmatpush1.bf16.msra.mxu0 0
      %663 = vmatprep.subr.bf16.mxu0 0
      %664 = vmatpush1.bf16.msra.mxu0 0
      %665 = vmatprep.subr.bf16.mxu0 0
      %666 = vmatpush1.bf16.msra.mxu0 0
      %667 = vmatprep.subr.bf16.mxu0 0
      %668 = vmatpush1.bf16.msra.mxu0 0
      %669 = vmatprep.subr.bf16.mxu0 0
      %670 = vmatpush1.bf16.msra.mxu0 0
      %671 = vmatprep.mubr.bf16.mxu0 0
      %672 = vmatmul.mubr.bf16.gmra.mrb[0].mxu0 %v625
      %v673 = vpop.f32.mrb[0].mxu0
      %v674 = vadd.f32 0.0, %v673
      %v675 = vpop.f32.mrb[0].mxu0
      %v676 = vpop.f32.mrb[0].mxu0
      %v677 = vadd.f32 0.0, %v676
      %v678 = vpop.f32.mrb[0].mxu0
      %679 = vmatprep.mubr.bf16.mxu0 0
      %680 = vmatmul.mubr.bf16.gmra.mrb[0].mxu0 %v628
      %v681 = vpop.f32.mrb[0].mxu0
      %v682 = vadd.f32 0.0, %v681
      %v683 = vpop.f32.mrb[0].mxu0
      %v684 = vpop.f32.mrb[0].mxu0
      %v685 = vadd.f32 0.0, %v684
      %v686 = vpop.f32.mrb[0].mxu0
      %687 = vmatprep.mubr.bf16.mxu0 0
      %688 = vmatmul.mubr.bf16.gmra.mrb[0].mxu0 %v631
      %v689 = vpop.f32.mrb[0].mxu0
      %v690 = vadd.f32 0.0, %v689
      %v691 = vpop.f32.mrb[0].mxu0
      %v692 = vpop.f32.mrb[0].mxu0
      %v693 = vadd.f32 0.0, %v692
      %v694 = vpop.f32.mrb[0].mxu0
      %695 = vmatprep.mubr.bf16.mxu0 0
      %696 = vmatmul.mubr.bf16.gmra.mrb[0].mxu0 %v634
      %v697 = vpop.f32.mrb[0].mxu0
      %v698 = vadd.f32 0.0, %v697
      %v699 = vpop.f32.mrb[0].mxu0
      %v700 = vpop.f32.mrb[0].mxu0
      %v701 = vadd.f32 0.0, %v700
      %v702 = vpop.f32.mrb[0].mxu0
      %703 = vdwg.mxu0
      %v704 = vadd.f32 %v580, %v674
      %v705 = vadd.f32 %v583, %v677
      %v706 = vadd.f32 %v588, %v682
      %v707 = vadd.f32 %v591, %v685
      %v708 = vadd.f32 %v596, %v690
      %v709 = vadd.f32 %v599, %v693
      %v710 = vadd.f32 %v604, %v698
      %v711 = vadd.f32 %v607, %v701
      %s712 = scalar_lea.vmem %s404, 16
      %v713 = vld [vmem:[%s712] sm:$0xff]
      %v714 = vld [vmem:[%s712 + $0x10] sm:$0xff]
      %v715 = vld [vmem:[%s712 + $0x20] sm:$0xff]
      %v716 = vld [vmem:[%s712 + $0x30] sm:$0xff]
      %v717 = vld [vmem:[%s712 + $0x40] sm:$0xff]
      %v718 = vld [vmem:[%s712 + $0x50] sm:$0xff]
      %v719 = vld [vmem:[%s712 + $0x60] sm:$0xff]
      %v720 = vld [vmem:[%s712 + $0x70] sm:$0xff]
      %v721 = vpack.c.bf16 %v714, %v713
      %v722 = vpack.c.bf16 %v716, %v715
      %v723 = vpack.c.bf16 %v718, %v717
      %v724 = vpack.c.bf16 %v720, %v719
      %s725 = scalar_lea.vmem %s4, 12
      %v726 = vld [vmem:[%s725] sm:$0xf]
      %v728 = vsel %vm448, %v721, 0
      %v731 = vsel %vm448, %v722, 0
      %v734 = vsel %vm448, %v723, 0
      %v737 = vsel %vm448, %v724, 0
      %v740 = vsel %vm461, %v726, 0
      %742 = vmatprep.subr.bf16.mxu0 0
      %743 = vmatpush1.bf16.msra.mxu0 %v740
      %744 = vmatprep.subr.bf16.mxu0 0
      %745 = vmatpush1.bf16.msra.mxu0 0
      %746 = vmatprep.subr.bf16.mxu0 0
      %747 = vmatpush1.bf16.msra.mxu0 0
      %748 = vmatprep.subr.bf16.mxu0 0
      %749 = vmatpush1.bf16.msra.mxu0 0
      %750 = vmatprep.subr.bf16.mxu0 0
      %751 = vmatpush1.bf16.msra.mxu0 0
      %752 = vmatprep.subr.bf16.mxu0 0
      %753 = vmatpush1.bf16.msra.mxu0 0
      %754 = vmatprep.subr.bf16.mxu0 0
      %755 = vmatpush1.bf16.msra.mxu0 0
      %756 = vmatprep.subr.bf16.mxu0 0
      %757 = vmatpush1.bf16.msra.mxu0 0
      %758 = vmatprep.subr.bf16.mxu0 0
      %759 = vmatpush1.bf16.msra.mxu0 0
      %760 = vmatprep.subr.bf16.mxu0 0
      %761 = vmatpush1.bf16.msra.mxu0 0
      %762 = vmatprep.subr.bf16.mxu0 0
      %763 = vmatpush1.bf16.msra.mxu0 0
      %764 = vmatprep.subr.bf16.mxu0 0
      %765 = vmatpush1.bf16.msra.mxu0 0
      %766 = vmatprep.subr.bf16.mxu0 0
      %767 = vmatpush1.bf16.msra.mxu0 0
      %768 = vmatprep.subr.bf16.mxu0 0
      %769 = vmatpush1.bf16.msra.mxu0 0
      %770 = vmatprep.subr.bf16.mxu0 0
      %771 = vmatpush1.bf16.msra.mxu0 0
      %772 = vmatprep.subr.bf16.mxu0 0
      %773 = vmatpush1.bf16.msra.mxu0 0
      %774 = vmatprep.mubr.bf16.mxu0 0
      %775 = vmatmul.mubr.bf16.gmra.mrb[0].mxu0 %v728
      %v776 = vpop.f32.mrb[0].mxu0
      %v777 = vadd.f32 0.0, %v776
      %v778 = vpop.f32.mrb[0].mxu0
      %v779 = vpop.f32.mrb[0].mxu0
      %v780 = vadd.f32 0.0, %v779
      %v781 = vpop.f32.mrb[0].mxu0
      %782 = vmatprep.mubr.bf16.mxu0 0
      %783 = vmatmul.mubr.bf16.gmra.mrb[0].mxu0 %v731
      %v784 = vpop.f32.mrb[0].mxu0
      %v785 = vadd.f32 0.0, %v784
      %v786 = vpop.f32.mrb[0].mxu0
      %v787 = vpop.f32.mrb[0].mxu0
      %v788 = vadd.f32 0.0, %v787
      %v789 = vpop.f32.mrb[0].mxu0
      %790 = vmatprep.mubr.bf16.mxu0 0
      %791 = vmatmul.mubr.bf16.gmra.mrb[0].mxu0 %v734
      %v792 = vpop.f32.mrb[0].mxu0
      %v793 = vadd.f32 0.0, %v792
      %v794 = vpop.f32.mrb[0].mxu0
      %v795 = vpop.f32.mrb[0].mxu0
      %v796 = vadd.f32 0.0, %v795
      %v797 = vpop.f32.mrb[0].mxu0
      %798 = vmatprep.mubr.bf16.mxu0 0
      %799 = vmatmul.mubr.bf16.gmra.mrb[0].mxu0 %v737
      %v800 = vpop.f32.mrb[0].mxu0
      %v801 = vadd.f32 0.0, %v800
      %v802 = vpop.f32.mrb[0].mxu0
      %v803 = vpop.f32.mrb[0].mxu0
      %v804 = vadd.f32 0.0, %v803
      %v805 = vpop.f32.mrb[0].mxu0
      %806 = vdwg.mxu0
      %v807 = vadd.f32 %v704, %v777
      %v808 = vadd.f32 %v705, %v780
      %v809 = vadd.f32 %v706, %v785
      %v810 = vadd.f32 %v707, %v788
      %v811 = vadd.f32 %v708, %v793
      %v812 = vadd.f32 %v709, %v796
      %v813 = vadd.f32 %v710, %v801
      %v814 = vadd.f32 %v711, %v804
      %s815 = scalar_lea.vmem %s399, 16
      %v816 = vld [vmem:[%s815 + $0x1] sm:$0xff]
      %v817 = vld [vmem:[%s815 + $0x11] sm:$0xff]
      %v818 = vld [vmem:[%s815 + $0x21] sm:$0xff]
      %v819 = vld [vmem:[%s815 + $0x31] sm:$0xff]
      %v820 = vld [vmem:[%s815 + $0x41] sm:$0xff]
      %v821 = vld [vmem:[%s815 + $0x51] sm:$0xff]
      %v822 = vld [vmem:[%s815 + $0x61] sm:$0xff]
      %v823 = vld [vmem:[%s815 + $0x71] sm:$0xff]
      %v824 = vpack.c.bf16 %v817, %v816
      %v825 = vpack.c.bf16 %v819, %v818
      %v826 = vpack.c.bf16 %v821, %v820
      %v827 = vpack.c.bf16 %v823, %v822
      %s828 = scalar_lea.vmem %s4, 16
      %v829 = vld [vmem:[%s828] sm:$0xf]
      %v831 = vsel %vm448, %v824, 0
      %v834 = vsel %vm448, %v825, 0
      %v837 = vsel %vm448, %v826, 0
      %v840 = vsel %vm448, %v827, 0
      %v843 = vsel %vm461, %v829, 0
      %845 = vmatprep.subr.bf16.mxu0 0
      %846 = vmatpush1.bf16.msra.mxu0 %v843
      %847 = vmatprep.subr.bf16.mxu0 0
      %848 = vmatpush1.bf16.msra.mxu0 0
      %849 = vmatprep.subr.bf16.mxu0 0
      %850 = vmatpush1.bf16.msra.mxu0 0
      %851 = vmatprep.subr.bf16.mxu0 0
      %852 = vmatpush1.bf16.msra.mxu0 0
      %853 = vmatprep.subr.bf16.mxu0 0
      %854 = vmatpush1.bf16.msra.mxu0 0
      %855 = vmatprep.subr.bf16.mxu0 0
      %856 = vmatpush1.bf16.msra.mxu0 0
      %857 = vmatprep.subr.bf16.mxu0 0
      %858 = vmatpush1.bf16.msra.mxu0 0
      %859 = vmatprep.subr.bf16.mxu0 0
      %860 = vmatpush1.bf16.msra.mxu0 0
      %861 = vmatprep.subr.bf16.mxu0 0
      %862 = vmatpush1.bf16.msra.mxu0 0
      %863 = vmatprep.subr.bf16.mxu0 0
      %864 = vmatpush1.bf16.msra.mxu0 0
      %865 = vmatprep.subr.bf16.mxu0 0
      %866 = vmatpush1.bf16.msra.mxu0 0
      %867 = vmatprep.subr.bf16.mxu0 0
      %868 = vmatpush1.bf16.msra.mxu0 0
      %869 = vmatprep.subr.bf16.mxu0 0
      %870 = vmatpush1.bf16.msra.mxu0 0
      %871 = vmatprep.subr.bf16.mxu0 0
      %872 = vmatpush1.bf16.msra.mxu0 0
      %873 = vmatprep.subr.bf16.mxu0 0
      %874 = vmatpush1.bf16.msra.mxu0 0
      %875 = vmatprep.subr.bf16.mxu0 0
      %876 = vmatpush1.bf16.msra.mxu0 0
      %877 = vmatprep.mubr.bf16.mxu0 0
      %878 = vmatmul.mubr.bf16.gmra.mrb[0].mxu0 %v831
      %v879 = vpop.f32.mrb[0].mxu0
      %v880 = vadd.f32 0.0, %v879
      %v881 = vpop.f32.mrb[0].mxu0
      %v882 = vpop.f32.mrb[0].mxu0
      %v883 = vadd.f32 0.0, %v882
      %v884 = vpop.f32.mrb[0].mxu0
      %885 = vmatprep.mubr.bf16.mxu0 0
      %886 = vmatmul.mubr.bf16.gmra.mrb[0].mxu0 %v834
      %v887 = vpop.f32.mrb[0].mxu0
      %v888 = vadd.f32 0.0, %v887
      %v889 = vpop.f32.mrb[0].mxu0
      %v890 = vpop.f32.mrb[0].mxu0
      %v891 = vadd.f32 0.0, %v890
      %v892 = vpop.f32.mrb[0].mxu0
      %893 = vmatprep.mubr.bf16.mxu0 0
      %894 = vmatmul.mubr.bf16.gmra.mrb[0].mxu0 %v837
      %v895 = vpop.f32.mrb[0].mxu0
      %v896 = vadd.f32 0.0, %v895
      %v897 = vpop.f32.mrb[0].mxu0
      %v898 = vpop.f32.mrb[0].mxu0
      %v899 = vadd.f32 0.0, %v898
      %v900 = vpop.f32.mrb[0].mxu0
      %901 = vmatprep.mubr.bf16.mxu0 0
      %902 = vmatmul.mubr.bf16.gmra.mrb[0].mxu0 %v840
      %v903 = vpop.f32.mrb[0].mxu0
      %v904 = vadd.f32 0.0, %v903
      %v905 = vpop.f32.mrb[0].mxu0
      %v906 = vpop.f32.mrb[0].mxu0
      %v907 = vadd.f32 0.0, %v906
      %v908 = vpop.f32.mrb[0].mxu0
      %909 = vdwg.mxu0
      %v910 = vadd.f32 %v807, %v880
      %v911 = vadd.f32 %v808, %v883
      %v912 = vadd.f32 %v809, %v888
      %v913 = vadd.f32 %v810, %v891
      %v914 = vadd.f32 %v811, %v896
      %v915 = vadd.f32 %v812, %v899
      %v916 = vadd.f32 %v813, %v904
      %v917 = vadd.f32 %v814, %v907
      %v918 = vld [vmem:[%s712 + $0x1] sm:$0xff]
      %v919 = vld [vmem:[%s712 + $0x11] sm:$0xff]
      %v920 = vld [vmem:[%s712 + $0x21] sm:$0xff]
      %v921 = vld [vmem:[%s712 + $0x31] sm:$0xff]
      %v922 = vld [vmem:[%s712 + $0x41] sm:$0xff]
      %v923 = vld [vmem:[%s712 + $0x51] sm:$0xff]
      %v924 = vld [vmem:[%s712 + $0x61] sm:$0xff]
      %v925 = vld [vmem:[%s712 + $0x71] sm:$0xff]
      %v926 = vpack.c.bf16 %v919, %v918
      %v927 = vpack.c.bf16 %v921, %v920
      %v928 = vpack.c.bf16 %v923, %v922
      %v929 = vpack.c.bf16 %v925, %v924
      %s930 = scalar_lea.vmem %s4, 20
      %v931 = vld [vmem:[%s930] sm:$0xf]
      %v933 = vsel %vm448, %v926, 0
      %v936 = vsel %vm448, %v927, 0
      %v939 = vsel %vm448, %v928, 0
      %v942 = vsel %vm448, %v929, 0
      %v945 = vsel %vm461, %v931, 0
      %947 = vmatprep.subr.bf16.mxu0 0
      %948 = vmatpush1.bf16.msra.mxu0 %v945
      %949 = vmatprep.subr.bf16.mxu0 0
      %950 = vmatpush1.bf16.msra.mxu0 0
      %951 = vmatprep.subr.bf16.mxu0 0
      %952 = vmatpush1.bf16.msra.mxu0 0
      %953 = vmatprep.subr.bf16.mxu0 0
      %954 = vmatpush1.bf16.msra.mxu0 0
      %955 = vmatprep.subr.bf16.mxu0 0
      %956 = vmatpush1.bf16.msra.mxu0 0
      %957 = vmatprep.subr.bf16.mxu0 0
      %958 = vmatpush1.bf16.msra.mxu0 0
      %959 = vmatprep.subr.bf16.mxu0 0
      %960 = vmatpush1.bf16.msra.mxu0 0
      %961 = vmatprep.subr.bf16.mxu0 0
      %962 = vmatpush1.bf16.msra.mxu0 0
      %963 = vmatprep.subr.bf16.mxu0 0
      %964 = vmatpush1.bf16.msra.mxu0 0
      %965 = vmatprep.subr.bf16.mxu0 0
      %966 = vmatpush1.bf16.msra.mxu0 0
      %967 = vmatprep.subr.bf16.mxu0 0
      %968 = vmatpush1.bf16.msra.mxu0 0
      %969 = vmatprep.subr.bf16.mxu0 0
      %970 = vmatpush1.bf16.msra.mxu0 0
      %971 = vmatprep.subr.bf16.mxu0 0
      %972 = vmatpush1.bf16.msra.mxu0 0
      %973 = vmatprep.subr.bf16.mxu0 0
      %974 = vmatpush1.bf16.msra.mxu0 0
      %975 = vmatprep.subr.bf16.mxu0 0
      %976 = vmatpush1.bf16.msra.mxu0 0
      %977 = vmatprep.subr.bf16.mxu0 0
      %978 = vmatpush1.bf16.msra.mxu0 0
      %979 = vmatprep.mubr.bf16.mxu0 0
      %980 = vmatmul.mubr.bf16.gmra.mrb[0].mxu0 %v933
      %v981 = vpop.f32.mrb[0].mxu0
      %v982 = vadd.f32 0.0, %v981
      %v983 = vpop.f32.mrb[0].mxu0
      %v984 = vpop.f32.mrb[0].mxu0
      %v985 = vadd.f32 0.0, %v984
      %v986 = vpop.f32.mrb[0].mxu0
      %987 = vmatprep.mubr.bf16.mxu0 0
      %988 = vmatmul.mubr.bf16.gmra.mrb[0].mxu0 %v936
      %v989 = vpop.f32.mrb[0].mxu0
      %v990 = vadd.f32 0.0, %v989
      %v991 = vpop.f32.mrb[0].mxu0
      %v992 = vpop.f32.mrb[0].mxu0
      %v993 = vadd.f32 0.0, %v992
      %v994 = vpop.f32.mrb[0].mxu0
      %995 = vmatprep.mubr.bf16.mxu0 0
      %996 = vmatmul.mubr.bf16.gmra.mrb[0].mxu0 %v939
      %v997 = vpop.f32.mrb[0].mxu0
      %v998 = vadd.f32 0.0, %v997
      %v999 = vpop.f32.mrb[0].mxu0
      %v1000 = vpop.f32.mrb[0].mxu0
      %v1001 = vadd.f32 0.0, %v1000
      %v1002 = vpop.f32.mrb[0].mxu0
      %1003 = vmatprep.mubr.bf16.mxu0 0
      %1004 = vmatmul.mubr.bf16.gmra.mrb[0].mxu0 %v942
      %v1005 = vpop.f32.mrb[0].mxu0
      %v1006 = vadd.f32 0.0, %v1005
      %v1007 = vpop.f32.mrb[0].mxu0
      %v1008 = vpop.f32.mrb[0].mxu0
      %v1009 = vadd.f32 0.0, %v1008
      %v1010 = vpop.f32.mrb[0].mxu0
      %1011 = vdwg.mxu0
      %v1012 = vadd.f32 %v910, %v982
      %v1013 = vadd.f32 %v911, %v985
      %v1014 = vadd.f32 %v912, %v990
      %v1015 = vadd.f32 %v913, %v993
      %v1016 = vadd.f32 %v914, %v998
      %v1017 = vadd.f32 %v915, %v1001
      %v1018 = vadd.f32 %v916, %v1006
      %v1019 = vadd.f32 %v917, %v1009
      %s1020 = scalar_lea.vmem %s414, 16
      %v1021 = vld [vmem:[%s1020] sm:$0xff]
      %v1022 = vld [vmem:[%s1020 + $0x10] sm:$0xff]
      %v1023 = vld [vmem:[%s1020 + $0x20] sm:$0xff]
      %v1024 = vld [vmem:[%s1020 + $0x30] sm:$0xff]
      %v1025 = vld [vmem:[%s1020 + $0x40] sm:$0xff]
      %v1026 = vld [vmem:[%s1020 + $0x50] sm:$0xff]
      %v1027 = vld [vmem:[%s1020 + $0x60] sm:$0xff]
      %v1028 = vld [vmem:[%s1020 + $0x70] sm:$0xff]
      %v1029 = vpack.c.bf16 %v1022, %v1021
      %v1030 = vpack.c.bf16 %v1024, %v1023
      %v1031 = vpack.c.bf16 %v1026, %v1025
      %v1032 = vpack.c.bf16 %v1028, %v1027
      %s1033 = scalar_lea.vmem %s4, 24
      %v1034 = vld [vmem:[%s1033] sm:$0xf]
      %v1036 = vsel %vm448, %v1029, 0
      %v1039 = vsel %vm448, %v1030, 0
      %v1042 = vsel %vm448, %v1031, 0
      %v1045 = vsel %vm448, %v1032, 0
      %v1048 = vsel %vm461, %v1034, 0
      %1050 = vmatprep.subr.bf16.mxu0 0
      %1051 = vmatpush1.bf16.msra.mxu0 %v1048
      %1052 = vmatprep.subr.bf16.mxu0 0
      %1053 = vmatpush1.bf16.msra.mxu0 0
      %1054 = vmatprep.subr.bf16.mxu0 0
      %1055 = vmatpush1.bf16.msra.mxu0 0
      %1056 = vmatprep.subr.bf16.mxu0 0
      %1057 = vmatpush1.bf16.msra.mxu0 0
      %1058 = vmatprep.subr.bf16.mxu0 0
      %1059 = vmatpush1.bf16.msra.mxu0 0
      %1060 = vmatprep.subr.bf16.mxu0 0
      %1061 = vmatpush1.bf16.msra.mxu0 0
      %1062 = vmatprep.subr.bf16.mxu0 0
      %1063 = vmatpush1.bf16.msra.mxu0 0
      %1064 = vmatprep.subr.bf16.mxu0 0
      %1065 = vmatpush1.bf16.msra.mxu0 0
      %1066 = vmatprep.subr.bf16.mxu0 0
      %1067 = vmatpush1.bf16.msra.mxu0 0
      %1068 = vmatprep.subr.bf16.mxu0 0
      %1069 = vmatpush1.bf16.msra.mxu0 0
      %1070 = vmatprep.subr.bf16.mxu0 0
      %1071 = vmatpush1.bf16.msra.mxu0 0
      %1072 = vmatprep.subr.bf16.mxu0 0
      %1073 = vmatpush1.bf16.msra.mxu0 0
      %1074 = vmatprep.subr.bf16.mxu0 0
      %1075 = vmatpush1.bf16.msra.mxu0 0
      %1076 = vmatprep.subr.bf16.mxu0 0
      %1077 = vmatpush1.bf16.msra.mxu0 0
      %1078 = vmatprep.subr.bf16.mxu0 0
      %1079 = vmatpush1.bf16.msra.mxu0 0
      %1080 = vmatprep.subr.bf16.mxu0 0
      %1081 = vmatpush1.bf16.msra.mxu0 0
      %1082 = vmatprep.mubr.bf16.mxu0 0
      %1083 = vmatmul.mubr.bf16.gmra.mrb[0].mxu0 %v1036
      %v1084 = vpop.f32.mrb[0].mxu0
      %v1085 = vadd.f32 0.0, %v1084
      %v1086 = vpop.f32.mrb[0].mxu0
      %v1087 = vpop.f32.mrb[0].mxu0
      %v1088 = vadd.f32 0.0, %v1087
      %v1089 = vpop.f32.mrb[0].mxu0
      %1090 = vmatprep.mubr.bf16.mxu0 0
      %1091 = vmatmul.mubr.bf16.gmra.mrb[0].mxu0 %v1039
      %v1092 = vpop.f32.mrb[0].mxu0
      %v1093 = vadd.f32 0.0, %v1092
      %v1094 = vpop.f32.mrb[0].mxu0
      %v1095 = vpop.f32.mrb[0].mxu0
      %v1096 = vadd.f32 0.0, %v1095
      %v1097 = vpop.f32.mrb[0].mxu0
      %1098 = vmatprep.mubr.bf16.mxu0 0
      %1099 = vmatmul.mubr.bf16.gmra.mrb[0].mxu0 %v1042
      %v1100 = vpop.f32.mrb[0].mxu0
      %v1101 = vadd.f32 0.0, %v1100
      %v1102 = vpop.f32.mrb[0].mxu0
      %v1103 = vpop.f32.mrb[0].mxu0
      %v1104 = vadd.f32 0.0, %v1103
      %v1105 = vpop.f32.mrb[0].mxu0
      %1106 = vmatprep.mubr.bf16.mxu0 0
      %1107 = vmatmul.mubr.bf16.gmra.mrb[0].mxu0 %v1045
      %v1108 = vpop.f32.mrb[0].mxu0
      %v1109 = vadd.f32 0.0, %v1108
      %v1110 = vpop.f32.mrb[0].mxu0
      %v1111 = vpop.f32.mrb[0].mxu0
      %v1112 = vadd.f32 0.0, %v1111
      %v1113 = vpop.f32.mrb[0].mxu0
      %1114 = vdwg.mxu0
      %v1115 = vadd.f32 %v1012, %v1085
      %v1116 = vadd.f32 %v1013, %v1088
      %v1117 = vadd.f32 %v1014, %v1093
      %v1118 = vadd.f32 %v1015, %v1096
      %v1119 = vadd.f32 %v1016, %v1101
      %v1120 = vadd.f32 %v1017, %v1104
      %v1121 = vadd.f32 %v1018, %v1109
      %v1122 = vadd.f32 %v1019, %v1112
      %s1123 = scalar_lea.vmem %s409, 16
      %v1124 = vld [vmem:[%s1123 + $0x1] sm:$0xff]
      %v1125 = vld [vmem:[%s1123 + $0x11] sm:$0xff]
      %v1126 = vld [vmem:[%s1123 + $0x21] sm:$0xff]
      %v1127 = vld [vmem:[%s1123 + $0x31] sm:$0xff]
      %v1128 = vld [vmem:[%s1123 + $0x41] sm:$0xff]
      %v1129 = vld [vmem:[%s1123 + $0x51] sm:$0xff]
      %v1130 = vld [vmem:[%s1123 + $0x61] sm:$0xff]
      %v1131 = vld [vmem:[%s1123 + $0x71] sm:$0xff]
      %v1132 = vpack.c.bf16 %v1125, %v1124
      %v1133 = vpack.c.bf16 %v1127, %v1126
      %v1134 = vpack.c.bf16 %v1129, %v1128
      %v1135 = vpack.c.bf16 %v1131, %v1130
      %s1136 = scalar_lea.vmem %s4, 28
      %v1137 = vld [vmem:[%s1136] sm:$0xf]
      %v1139 = vsel %vm448, %v1132, 0
      %v1142 = vsel %vm448, %v1133, 0
      %v1145 = vsel %vm448, %v1134, 0
      %v1148 = vsel %vm448, %v1135, 0
      %v1151 = vsel %vm461, %v1137, 0
      %1153 = vmatprep.subr.bf16.mxu0 0
      %1154 = vmatpush1.bf16.msra.mxu0 %v1151
      %1155 = vmatprep.subr.bf16.mxu0 0
      %1156 = vmatpush1.bf16.msra.mxu0 0
      %1157 = vmatprep.subr.bf16.mxu0 0
      %1158 = vmatpush1.bf16.msra.mxu0 0
      %1159 = vmatprep.subr.bf16.mxu0 0
      %1160 = vmatpush1.bf16.msra.mxu0 0
      %1161 = vmatprep.subr.bf16.mxu0 0
      %1162 = vmatpush1.bf16.msra.mxu0 0
      %1163 = vmatprep.subr.bf16.mxu0 0
      %1164 = vmatpush1.bf16.msra.mxu0 0
      %1165 = vmatprep.subr.bf16.mxu0 0
      %1166 = vmatpush1.bf16.msra.mxu0 0
      %1167 = vmatprep.subr.bf16.mxu0 0
      %1168 = vmatpush1.bf16.msra.mxu0 0
      %1169 = vmatprep.subr.bf16.mxu0 0
      %1170 = vmatpush1.bf16.msra.mxu0 0
      %1171 = vmatprep.subr.bf16.mxu0 0
      %1172 = vmatpush1.bf16.msra.mxu0 0
      %1173 = vmatprep.subr.bf16.mxu0 0
      %1174 = vmatpush1.bf16.msra.mxu0 0
      %1175 = vmatprep.subr.bf16.mxu0 0
      %1176 = vmatpush1.bf16.msra.mxu0 0
      %1177 = vmatprep.subr.bf16.mxu0 0
      %1178 = vmatpush1.bf16.msra.mxu0 0
      %1179 = vmatprep.subr.bf16.mxu0 0
      %1180 = vmatpush1.bf16.msra.mxu0 0
      %1181 = vmatprep.subr.bf16.mxu0 0
      %1182 = vmatpush1.bf16.msra.mxu0 0
      %1183 = vmatprep.subr.bf16.mxu0 0
      %1184 = vmatpush1.bf16.msra.mxu0 0
      %1185 = vmatprep.mubr.bf16.mxu0 0
      %1186 = vmatmul.mubr.bf16.gmra.mrb[0].mxu0 %v1139
      %v1187 = vpop.f32.mrb[0].mxu0
      %v1188 = vadd.f32 0.0, %v1187
      %v1189 = vpop.f32.mrb[0].mxu0
      %v1190 = vpop.f32.mrb[0].mxu0
      %v1191 = vadd.f32 0.0, %v1190
      %v1192 = vpop.f32.mrb[0].mxu0
      %1193 = vmatprep.mubr.bf16.mxu0 0
      %1194 = vmatmul.mubr.bf16.gmra.mrb[0].mxu0 %v1142
      %v1195 = vpop.f32.mrb[0].mxu0
      %v1196 = vadd.f32 0.0, %v1195
      %v1197 = vpop.f32.mrb[0].mxu0
      %v1198 = vpop.f32.mrb[0].mxu0
      %v1199 = vadd.f32 0.0, %v1198
      %v1200 = vpop.f32.mrb[0].mxu0
      %1201 = vmatprep.mubr.bf16.mxu0 0
      %1202 = vmatmul.mubr.bf16.gmra.mrb[0].mxu0 %v1145
      %v1203 = vpop.f32.mrb[0].mxu0
      %v1204 = vadd.f32 0.0, %v1203
      %v1205 = vpop.f32.mrb[0].mxu0
      %v1206 = vpop.f32.mrb[0].mxu0
      %v1207 = vadd.f32 0.0, %v1206
      %v1208 = vpop.f32.mrb[0].mxu0
      %1209 = vmatprep.mubr.bf16.mxu0 0
      %1210 = vmatmul.mubr.bf16.gmra.mrb[0].mxu0 %v1148
      %v1211 = vpop.f32.mrb[0].mxu0
      %v1212 = vadd.f32 0.0, %v1211
      %v1213 = vpop.f32.mrb[0].mxu0
      %v1214 = vpop.f32.mrb[0].mxu0
      %v1215 = vadd.f32 0.0, %v1214
      %v1216 = vpop.f32.mrb[0].mxu0
      %1217 = vdwg.mxu0
      %v1218 = vadd.f32 %v1115, %v1188
      %v1219 = vadd.f32 %v1116, %v1191
      %v1220 = vadd.f32 %v1117, %v1196
      %v1221 = vadd.f32 %v1118, %v1199
      %v1222 = vadd.f32 %v1119, %v1204
      %v1223 = vadd.f32 %v1120, %v1207
      %v1224 = vadd.f32 %v1121, %v1212
      %v1225 = vadd.f32 %v1122, %v1215
      %v1226 = vld [vmem:[%s1020 + $0x1] sm:$0xff]
      %v1227 = vld [vmem:[%s1020 + $0x11] sm:$0xff]
      %v1228 = vld [vmem:[%s1020 + $0x21] sm:$0xff]
      %v1229 = vld [vmem:[%s1020 + $0x31] sm:$0xff]
      %v1230 = vld [vmem:[%s1020 + $0x41] sm:$0xff]
      %v1231 = vld [vmem:[%s1020 + $0x51] sm:$0xff]
      %v1232 = vld [vmem:[%s1020 + $0x61] sm:$0xff]
      %v1233 = vld [vmem:[%s1020 + $0x71] sm:$0xff]
      %v1234 = vpack.c.bf16 %v1227, %v1226
      %v1235 = vpack.c.bf16 %v1229, %v1228
      %v1236 = vpack.c.bf16 %v1231, %v1230
      %v1237 = vpack.c.bf16 %v1233, %v1232
      %s1238 = scalar_lea.vmem %s4, 32
      %v1239 = vld [vmem:[%s1238] sm:$0xf]
      %v1241 = vsel %vm448, %v1234, 0
      %v1244 = vsel %vm448, %v1235, 0
      %v1247 = vsel %vm448, %v1236, 0
      %v1250 = vsel %vm448, %v1237, 0
      %v1253 = vsel %vm461, %v1239, 0
      %1255 = vmatprep.subr.bf16.mxu0 0
      %1256 = vmatpush1.bf16.msra.mxu0 %v1253
      %1257 = vmatprep.subr.bf16.mxu0 0
      %1258 = vmatpush1.bf16.msra.mxu0 0
      %1259 = vmatprep.subr.bf16.mxu0 0
      %1260 = vmatpush1.bf16.msra.mxu0 0
      %1261 = vmatprep.subr.bf16.mxu0 0
      %1262 = vmatpush1.bf16.msra.mxu0 0
      %1263 = vmatprep.subr.bf16.mxu0 0
      %1264 = vmatpush1.bf16.msra.mxu0 0
      %1265 = vmatprep.subr.bf16.mxu0 0
      %1266 = vmatpush1.bf16.msra.mxu0 0
      %1267 = vmatprep.subr.bf16.mxu0 0
      %1268 = vmatpush1.bf16.msra.mxu0 0
      %1269 = vmatprep.subr.bf16.mxu0 0
      %1270 = vmatpush1.bf16.msra.mxu0 0
      %1271 = vmatprep.subr.bf16.mxu0 0
      %1272 = vmatpush1.bf16.msra.mxu0 0
      %1273 = vmatprep.subr.bf16.mxu0 0
      %1274 = vmatpush1.bf16.msra.mxu0 0
      %1275 = vmatprep.subr.bf16.mxu0 0
      %1276 = vmatpush1.bf16.msra.mxu0 0
      %1277 = vmatprep.subr.bf16.mxu0 0
      %1278 = vmatpush1.bf16.msra.mxu0 0
      %1279 = vmatprep.subr.bf16.mxu0 0
      %1280 = vmatpush1.bf16.msra.mxu0 0
      %1281 = vmatprep.subr.bf16.mxu0 0
      %1282 = vmatpush1.bf16.msra.mxu0 0
      %1283 = vmatprep.subr.bf16.mxu0 0
      %1284 = vmatpush1.bf16.msra.mxu0 0
      %1285 = vmatprep.subr.bf16.mxu0 0
      %1286 = vmatpush1.bf16.msra.mxu0 0
      %1287 = vmatprep.mubr.bf16.mxu0 0
      %1288 = vmatmul.mubr.bf16.gmra.mrb[0].mxu0 %v1241
      %v1289 = vpop.f32.mrb[0].mxu0
      %v1290 = vadd.f32 0.0, %v1289
      %v1291 = vpop.f32.mrb[0].mxu0
      %v1292 = vpop.f32.mrb[0].mxu0
      %v1293 = vadd.f32 0.0, %v1292
      %v1294 = vpop.f32.mrb[0].mxu0
      %1295 = vmatprep.mubr.bf16.mxu0 0
      %1296 = vmatmul.mubr.bf16.gmra.mrb[0].mxu0 %v1244
      %v1297 = vpop.f32.mrb[0].mxu0
      %v1298 = vadd.f32 0.0, %v1297
      %v1299 = vpop.f32.mrb[0].mxu0
      %v1300 = vpop.f32.mrb[0].mxu0
      %v1301 = vadd.f32 0.0, %v1300
      %v1302 = vpop.f32.mrb[0].mxu0
      %1303 = vmatprep.mubr.bf16.mxu0 0
      %1304 = vmatmul.mubr.bf16.gmra.mrb[0].mxu0 %v1247
      %v1305 = vpop.f32.mrb[0].mxu0
      %v1306 = vadd.f32 0.0, %v1305
      %v1307 = vpop.f32.mrb[0].mxu0
      %v1308 = vpop.f32.mrb[0].mxu0
      %v1309 = vadd.f32 0.0, %v1308
      %v1310 = vpop.f32.mrb[0].mxu0
      %1311 = vmatprep.mubr.bf16.mxu0 0
      %1312 = vmatmul.mubr.bf16.gmra.mrb[0].mxu0 %v1250
      %v1313 = vpop.f32.mrb[0].mxu0
      %v1314 = vadd.f32 0.0, %v1313
      %v1315 = vpop.f32.mrb[0].mxu0
      %v1316 = vpop.f32.mrb[0].mxu0
      %v1317 = vadd.f32 0.0, %v1316
      %v1318 = vpop.f32.mrb[0].mxu0
      %1319 = vdwg.mxu0
      %v1320 = vadd.f32 %v1218, %v1290
      %v1321 = vadd.f32 %v1219, %v1293
      %v1322 = vadd.f32 %v1220, %v1298
      %v1323 = vadd.f32 %v1221, %v1301
      %v1324 = vadd.f32 %v1222, %v1306
      %v1325 = vadd.f32 %v1223, %v1309
      %v1326 = vadd.f32 %v1224, %v1314
      %v1327 = vadd.f32 %v1225, %v1317
      %v1328 = vld [vmem:[%s5] sm:$0x1]
      %v1330 = vlaneseq
      %v1331 = vshrl.u32 %v1330, 7
      %v1332 = vsub.s32 0, %v1331
      %v1333 = vrot.slane %v1328, %v1332
      %v1335 = vadd.f32 %v1320, %v1333
      %v1336 = vadd.f32 %v1321, %v1333
      %v1337 = vadd.f32 %v1322, %v1333
      %v1338 = vadd.f32 %v1323, %v1333
      %v1339 = vadd.f32 %v1324, %v1333
      %v1340 = vadd.f32 %v1325, %v1333
      %v1341 = vadd.f32 %v1326, %v1333
      %v1342 = vadd.f32 %v1327, %v1333
      %v1343 = vmax.f32 %v1335, 0.0
      %v1344 = vmax.f32 %v1336, 0.0
      %v1345 = vmax.f32 %v1337, 0.0
      %v1346 = vmax.f32 %v1338, 0.0
      %v1347 = vmax.f32 %v1339, 0.0
      %v1348 = vmax.f32 %v1340, 0.0
      %v1349 = vmax.f32 %v1341, 0.0
      %v1350 = vmax.f32 %v1342, 0.0
      %vm1351 = vcmask 130048
      %1352 = vst.msk [vmem:[#allocation2] sm:$0xff] %vm1351, 0.0
      %vm1353 = vcmask 123904
      %1354 = vst.msk [vmem:[#allocation2 + $0x8] sm:$0x3] %vm1353, 0.0
      %1355 = vst.msk [vmem:[#allocation2 + $0x10] sm:$0xff] %vm1351, 0.0
      %1356 = vst.msk [vmem:[#allocation2 + $0x18] sm:$0x3] %vm1353, 0.0
      %1357 = vst.msk [vmem:[#allocation2 + $0x20] sm:$0xff] %vm1351, 0.0
      %1358 = vst.msk [vmem:[#allocation2 + $0x28] sm:$0x3] %vm1353, 0.0
      %1359 = vst.msk [vmem:[#allocation2 + $0x30] sm:$0xff] %vm1351, 0.0
      %1360 = vst.msk [vmem:[#allocation2 + $0x38] sm:$0x3] %vm1353, 0.0
      %1361 = vst.msk [vmem:[#allocation2 + $0x40] sm:$0xff] %vm1351, 0.0
      %1362 = vst.msk [vmem:[#allocation2 + $0x48] sm:$0x3] %vm1353, 0.0
      %1363 = vst.msk [vmem:[#allocation2 + $0x50] sm:$0xff] %vm1351, 0.0
      %1364 = vst.msk [vmem:[#allocation2 + $0x58] sm:$0x3] %vm1353, 0.0
      %1365 = vst.msk [vmem:[#allocation2 + $0x60] sm:$0xff] %vm1351, 0.0
      %1366 = vst.msk [vmem:[#allocation2 + $0x68] sm:$0x3] %vm1353, 0.0
      %1367 = vst.msk [vmem:[#allocation2 + $0x70] sm:$0xff] %vm1351, 0.0
      %1368 = vst.msk [vmem:[#allocation2 + $0x78] sm:$0x3] %vm1353, 0.0
      %1369 = vst.msk [vmem:[#allocation2 + $0x80] sm:$0xff] %vm1351, 0.0
      %1370 = vst.msk [vmem:[#allocation2 + $0x88] sm:$0x3] %vm1353, 0.0
      %1371 = vst.msk [vmem:[#allocation2 + $0x90] sm:$0xff] %vm1351, 0.0
      %1372 = vst.msk [vmem:[#allocation2 + $0x98] sm:$0x3] %vm1353, 0.0
      %s1373 = scalar_lea.vmem [#allocation2], 16
      %1374 = vst.msk [vmem:[%s1373 + $0x1] sm:$0xff] %vm1351, %v1343
      %1375 = vst.msk [vmem:[%s1373 + $0x11] sm:$0xff] %vm1351, %v1344
      %1376 = vst.msk [vmem:[%s1373 + $0x21] sm:$0xff] %vm1351, %v1345
      %1377 = vst.msk [vmem:[%s1373 + $0x31] sm:$0xff] %vm1351, %v1346
      %1378 = vst.msk [vmem:[%s1373 + $0x41] sm:$0xff] %vm1351, %v1347
      %1379 = vst.msk [vmem:[%s1373 + $0x51] sm:$0xff] %vm1351, %v1348
      %1380 = vst.msk [vmem:[%s1373 + $0x61] sm:$0xff] %vm1351, %v1349
      %1381 = vst.msk [vmem:[%s1373 + $0x71] sm:$0xff] %vm1351, %v1350
      %v1382 = vld [vmem:[#allocation2] sm:$0xff]
      %v1383 = vld [vmem:[#allocation2 + $0x10] sm:$0xff]
      %v1384 = vld [vmem:[#allocation2 + $0x20] sm:$0xff]
      %v1385 = vld [vmem:[#allocation2 + $0x30] sm:$0xff]
      %v1386 = vld [vmem:[#allocation2 + $0x40] sm:$0xff]
      %v1387 = vld [vmem:[#allocation2 + $0x50] sm:$0xff]
      %v1388 = vld [vmem:[#allocation2 + $0x60] sm:$0xff]
      %v1389 = vld [vmem:[#allocation2 + $0x70] sm:$0xff]
      %v1390 = vpack.c.bf16 %v1383, %v1382
      %v1391 = vpack.c.bf16 %v1385, %v1384
      %v1392 = vpack.c.bf16 %v1387, %v1386
      %v1393 = vpack.c.bf16 %v1389, %v1388
      %v1394 = vld [vmem:[%s6] sm:$0xf]
      %v1395 = vld [vmem:[%s6 + $0x4] sm:$0xf]
      %v1396 = vld [vmem:[#allocation2 + $0x1] sm:$0xff]
      %v1397 = vld [vmem:[#allocation2 + $0x11] sm:$0xff]
      %v1398 = vld [vmem:[#allocation2 + $0x21] sm:$0xff]
      %v1399 = vld [vmem:[#allocation2 + $0x31] sm:$0xff]
      %v1400 = vld [vmem:[#allocation2 + $0x41] sm:$0xff]
      %v1401 = vld [vmem:[#allocation2 + $0x51] sm:$0xff]
      %v1402 = vld [vmem:[#allocation2 + $0x61] sm:$0xff]
      %v1403 = vld [vmem:[#allocation2 + $0x71] sm:$0xff]
      %v1404 = vpack.c.bf16 %v1397, %v1396
      %v1405 = vpack.c.bf16 %v1399, %v1398
      %v1406 = vpack.c.bf16 %v1401, %v1400
      %v1407 = vpack.c.bf16 %v1403, %v1402
      %s1408 = scalar_lea.vmem %s6, 8
      %v1409 = vld [vmem:[%s1408] sm:$0xf]
      %v1410 = vld [vmem:[%s1408 + $0x4] sm:$0xf]
      %v1413 = vunpack.c.l.b16 %v1409
      %v1414 = vunpack.c.l.b16 %v1410
      %v1415 = vpack.c.b16 %v1414, %v1413
      %v1418 = vsel %vm1351, %v1404, 0
      %v1421 = vsel %vm1351, %v1405, 0
      %v1424 = vsel %vm1351, %v1406, 0
      %v1427 = vsel %vm1351, %v1407, 0
      %1429 = vmatprep.subr.bf16.mxu0 0
      %1430 = vmatpush1.bf16.msra.mxu0 %v1415
      %1431 = vmatprep.subr.bf16.mxu0 0
      %1432 = vmatpush1.bf16.msra.mxu0 0
      %1433 = vmatprep.subr.bf16.mxu0 0
      %1434 = vmatpush1.bf16.msra.mxu0 0
      %1435 = vmatprep.subr.bf16.mxu0 0
      %1436 = vmatpush1.bf16.msra.mxu0 0
      %1437 = vmatprep.subr.bf16.mxu0 0
      %1438 = vmatpush1.bf16.msra.mxu0 0
      %1439 = vmatprep.subr.bf16.mxu0 0
      %1440 = vmatpush1.bf16.msra.mxu0 0
      %1441 = vmatprep.subr.bf16.mxu0 0
      %1442 = vmatpush1.bf16.msra.mxu0 0
      %1443 = vmatprep.subr.bf16.mxu0 0
      %1444 = vmatpush1.bf16.msra.mxu0 0
      %1445 = vmatprep.subr.bf16.mxu0 0
      %1446 = vmatpush1.bf16.msra.mxu0 0
      %1447 = vmatprep.subr.bf16.mxu0 0
      %1448 = vmatpush1.bf16.msra.mxu0 0
      %1449 = vmatprep.subr.bf16.mxu0 0
      %1450 = vmatpush1.bf16.msra.mxu0 0
      %1451 = vmatprep.subr.bf16.mxu0 0
      %1452 = vmatpush1.bf16.msra.mxu0 0
      %1453 = vmatprep.subr.bf16.mxu0 0
      %1454 = vmatpush1.bf16.msra.mxu0 0
      %1455 = vmatprep.subr.bf16.mxu0 0
      %1456 = vmatpush1.bf16.msra.mxu0 0
      %1457 = vmatprep.subr.bf16.mxu0 0
      %1458 = vmatpush1.bf16.msra.mxu0 0
      %1459 = vmatprep.subr.bf16.mxu0 0
      %1460 = vmatpush1.bf16.msra.mxu0 0
      %1461 = vmatprep.mubr.bf16.mxu0 0
      %1462 = vmatmul.mubr.bf16.gmra.mrb[0].mxu0 %v1418
      %v1463 = vpop.f32.mrb[0].mxu0
      %v1464 = vadd.f32 0.0, %v1463
      %v1465 = vpop.f32.mrb[0].mxu0
      %v1466 = vpop.f32.mrb[0].mxu0
      %v1467 = vadd.f32 0.0, %v1466
      %v1468 = vpop.f32.mrb[0].mxu0
      %1469 = vmatprep.mubr.bf16.mxu0 0
      %1470 = vmatmul.mubr.bf16.gmra.mrb[0].mxu0 %v1421
      %v1471 = vpop.f32.mrb[0].mxu0
      %v1472 = vadd.f32 0.0, %v1471
      %v1473 = vpop.f32.mrb[0].mxu0
      %v1474 = vpop.f32.mrb[0].mxu0
      %v1475 = vadd.f32 0.0, %v1474
      %v1476 = vpop.f32.mrb[0].mxu0
      %1477 = vmatprep.mubr.bf16.mxu0 0
      %1478 = vmatmul.mubr.bf16.gmra.mrb[0].mxu0 %v1424
      %v1479 = vpop.f32.mrb[0].mxu0
      %v1480 = vadd.f32 0.0, %v1479
      %v1481 = vpop.f32.mrb[0].mxu0
      %v1482 = vpop.f32.mrb[0].mxu0
      %v1483 = vadd.f32 0.0, %v1482
      %v1484 = vpop.f32.mrb[0].mxu0
      %1485 = vmatprep.mubr.bf16.mxu0 0
      %1486 = vmatmul.mubr.bf16.gmra.mrb[0].mxu0 %v1427
      %v1487 = vpop.f32.mrb[0].mxu0
      %v1488 = vadd.f32 0.0, %v1487
      %v1489 = vpop.f32.mrb[0].mxu0
      %v1490 = vpop.f32.mrb[0].mxu0
      %v1491 = vadd.f32 0.0, %v1490
      %v1492 = vpop.f32.mrb[0].mxu0
      %1493 = vdwg.mxu0
      %v1496 = vunpack.c.l.b16 %v1394
      %v1497 = vunpack.c.l.b16 %v1395
      %v1498 = vpack.c.b16 %v1497, %v1496
      %v1501 = vsel %vm1351, %v1390, 0
      %v1504 = vsel %vm1351, %v1391, 0
      %v1507 = vsel %vm1351, %v1392, 0
      %v1510 = vsel %vm1351, %v1393, 0
      %1512 = vmatprep.subr.bf16.mxu0 0
      %1513 = vmatpush1.bf16.msra.mxu0 %v1498
      %1514 = vmatprep.subr.bf16.mxu0 0
      %1515 = vmatpush1.bf16.msra.mxu0 0
      %1516 = vmatprep.subr.bf16.mxu0 0
      %1517 = vmatpush1.bf16.msra.mxu0 0
      %1518 = vmatprep.subr.bf16.mxu0 0
      %1519 = vmatpush1.bf16.msra.mxu0 0
      %1520 = vmatprep.subr.bf16.mxu0 0
      %1521 = vmatpush1.bf16.msra.mxu0 0
      %1522 = vmatprep.subr.bf16.mxu0 0
      %1523 = vmatpush1.bf16.msra.mxu0 0
      %1524 = vmatprep.subr.bf16.mxu0 0
      %1525 = vmatpush1.bf16.msra.mxu0 0
      %1526 = vmatprep.subr.bf16.mxu0 0
      %1527 = vmatpush1.bf16.msra.mxu0 0
      %1528 = vmatprep.subr.bf16.mxu0 0
      %1529 = vmatpush1.bf16.msra.mxu0 0
      %1530 = vmatprep.subr.bf16.mxu0 0
      %1531 = vmatpush1.bf16.msra.mxu0 0
      %1532 = vmatprep.subr.bf16.mxu0 0
      %1533 = vmatpush1.bf16.msra.mxu0 0
      %1534 = vmatprep.subr.bf16.mxu0 0
      %1535 = vmatpush1.bf16.msra.mxu0 0
      %1536 = vmatprep.subr.bf16.mxu0 0
      %1537 = vmatpush1.bf16.msra.mxu0 0
      %1538 = vmatprep.subr.bf16.mxu0 0
      %1539 = vmatpush1.bf16.msra.mxu0 0
      %1540 = vmatprep.subr.bf16.mxu0 0
      %1541 = vmatpush1.bf16.msra.mxu0 0
      %1542 = vmatprep.subr.bf16.mxu0 0
      %1543 = vmatpush1.bf16.msra.mxu0 0
      %1544 = vmatprep.mubr.bf16.mxu0 0
      %1545 = vmatmul.mubr.bf16.gmra.mrb[0].mxu0 %v1501
      %v1546 = vpop.f32.mrb[0].mxu0
      %v1547 = vadd.f32 %v1464, %v1546
      %v1548 = vpop.f32.mrb[0].mxu0
      %v1549 = vpop.f32.mrb[0].mxu0
      %v1550 = vadd.f32 %v1467, %v1549
      %v1551 = vpop.f32.mrb[0].mxu0
      %1552 = vmatprep.mubr.bf16.mxu0 0
      %1553 = vmatmul.mubr.bf16.gmra.mrb[0].mxu0 %v1504
      %v1554 = vpop.f32.mrb[0].mxu0
      %v1555 = vadd.f32 %v1472, %v1554
      %v1556 = vpop.f32.mrb[0].mxu0
      %v1557 = vpop.f32.mrb[0].mxu0
      %v1558 = vadd.f32 %v1475, %v1557
      %v1559 = vpop.f32.mrb[0].mxu0
      %1560 = vmatprep.mubr.bf16.mxu0 0
      %1561 = vmatmul.mubr.bf16.gmra.mrb[0].mxu0 %v1507
      %v1562 = vpop.f32.mrb[0].mxu0
      %v1563 = vadd.f32 %v1480, %v1562
      %v1564 = vpop.f32.mrb[0].mxu0
      %v1565 = vpop.f32.mrb[0].mxu0
      %v1566 = vadd.f32 %v1483, %v1565
      %v1567 = vpop.f32.mrb[0].mxu0
      %1568 = vmatprep.mubr.bf16.mxu0 0
      %1569 = vmatmul.mubr.bf16.gmra.mrb[0].mxu0 %v1510
      %v1570 = vpop.f32.mrb[0].mxu0
      %v1571 = vadd.f32 %v1488, %v1570
      %v1572 = vpop.f32.mrb[0].mxu0
      %v1573 = vpop.f32.mrb[0].mxu0
      %v1574 = vadd.f32 %v1491, %v1573
      %v1575 = vpop.f32.mrb[0].mxu0
      %1576 = vdwg.mxu0
      %v1577 = vld [vmem:[#allocation2 + $0x2] sm:$0xff]
      %v1578 = vld [vmem:[#allocation2 + $0x12] sm:$0xff]
      %v1579 = vld [vmem:[#allocation2 + $0x22] sm:$0xff]
      %v1580 = vld [vmem:[#allocation2 + $0x32] sm:$0xff]
      %v1581 = vld [vmem:[#allocation2 + $0x42] sm:$0xff]
      %v1582 = vld [vmem:[#allocation2 + $0x52] sm:$0xff]
      %v1583 = vld [vmem:[#allocation2 + $0x62] sm:$0xff]
      %v1584 = vld [vmem:[#allocation2 + $0x72] sm:$0xff]
      %v1585 = vpack.c.bf16 %v1578, %v1577
      %v1586 = vpack.c.bf16 %v1580, %v1579
      %v1587 = vpack.c.bf16 %v1582, %v1581
      %v1588 = vpack.c.bf16 %v1584, %v1583
      %s1589 = scalar_lea.vmem %s6, 16
      %v1590 = vld [vmem:[%s1589] sm:$0xf]
      %v1591 = vld [vmem:[%s1589 + $0x4] sm:$0xf]
      %v1594 = vunpack.c.l.b16 %v1590
      %v1595 = vunpack.c.l.b16 %v1591
      %v1596 = vpack.c.b16 %v1595, %v1594
      %v1599 = vsel %vm1351, %v1585, 0
      %v1602 = vsel %vm1351, %v1586, 0
      %v1605 = vsel %vm1351, %v1587, 0
      %v1608 = vsel %vm1351, %v1588, 0
      %1610 = vmatprep.subr.bf16.mxu0 0
      %1611 = vmatpush1.bf16.msra.mxu0 %v1596
      %1612 = vmatprep.subr.bf16.mxu0 0
      %1613 = vmatpush1.bf16.msra.mxu0 0
      %1614 = vmatprep.subr.bf16.mxu0 0
      %1615 = vmatpush1.bf16.msra.mxu0 0
      %1616 = vmatprep.subr.bf16.mxu0 0
      %1617 = vmatpush1.bf16.msra.mxu0 0
      %1618 = vmatprep.subr.bf16.mxu0 0
      %1619 = vmatpush1.bf16.msra.mxu0 0
      %1620 = vmatprep.subr.bf16.mxu0 0
      %1621 = vmatpush1.bf16.msra.mxu0 0
      %1622 = vmatprep.subr.bf16.mxu0 0
      %1623 = vmatpush1.bf16.msra.mxu0 0
      %1624 = vmatprep.subr.bf16.mxu0 0
      %1625 = vmatpush1.bf16.msra.mxu0 0
      %1626 = vmatprep.subr.bf16.mxu0 0
      %1627 = vmatpush1.bf16.msra.mxu0 0
      %1628 = vmatprep.subr.bf16.mxu0 0
      %1629 = vmatpush1.bf16.msra.mxu0 0
      %1630 = vmatprep.subr.bf16.mxu0 0
      %1631 = vmatpush1.bf16.msra.mxu0 0
      %1632 = vmatprep.subr.bf16.mxu0 0
      %1633 = vmatpush1.bf16.msra.mxu0 0
      %1634 = vmatprep.subr.bf16.mxu0 0
      %1635 = vmatpush1.bf16.msra.mxu0 0
      %1636 = vmatprep.subr.bf16.mxu0 0
      %1637 = vmatpush1.bf16.msra.mxu0 0
      %1638 = vmatprep.subr.bf16.mxu0 0
      %1639 = vmatpush1.bf16.msra.mxu0 0
      %1640 = vmatprep.subr.bf16.mxu0 0
      %1641 = vmatpush1.bf16.msra.mxu0 0
      %1642 = vmatprep.mubr.bf16.mxu0 0
      %1643 = vmatmul.mubr.bf16.gmra.mrb[0].mxu0 %v1599
      %v1644 = vpop.f32.mrb[0].mxu0
      %v1645 = vadd.f32 0.0, %v1644
      %v1646 = vpop.f32.mrb[0].mxu0
      %v1647 = vpop.f32.mrb[0].mxu0
      %v1648 = vadd.f32 0.0, %v1647
      %v1649 = vpop.f32.mrb[0].mxu0
      %1650 = vmatprep.mubr.bf16.mxu0 0
      %1651 = vmatmul.mubr.bf16.gmra.mrb[0].mxu0 %v1602
      %v1652 = vpop.f32.mrb[0].mxu0
      %v1653 = vadd.f32 0.0, %v1652
      %v1654 = vpop.f32.mrb[0].mxu0
      %v1655 = vpop.f32.mrb[0].mxu0
      %v1656 = vadd.f32 0.0, %v1655
      %v1657 = vpop.f32.mrb[0].mxu0
      %1658 = vmatprep.mubr.bf16.mxu0 0
      %1659 = vmatmul.mubr.bf16.gmra.mrb[0].mxu0 %v1605
      %v1660 = vpop.f32.mrb[0].mxu0
      %v1661 = vadd.f32 0.0, %v1660
      %v1662 = vpop.f32.mrb[0].mxu0
      %v1663 = vpop.f32.mrb[0].mxu0
      %v1664 = vadd.f32 0.0, %v1663
      %v1665 = vpop.f32.mrb[0].mxu0
      %1666 = vmatprep.mubr.bf16.mxu0 0
      %1667 = vmatmul.mubr.bf16.gmra.mrb[0].mxu0 %v1608
      %v1668 = vpop.f32.mrb[0].mxu0
      %v1669 = vadd.f32 0.0, %v1668
      %v1670 = vpop.f32.mrb[0].mxu0
      %v1671 = vpop.f32.mrb[0].mxu0
      %v1672 = vadd.f32 0.0, %v1671
      %v1673 = vpop.f32.mrb[0].mxu0
      %1674 = vdwg.mxu0
      %v1675 = vadd.f32 %v1547, %v1645
      %v1676 = vadd.f32 %v1550, %v1648
      %v1677 = vadd.f32 %v1555, %v1653
      %v1678 = vadd.f32 %v1558, %v1656
      %v1679 = vadd.f32 %v1563, %v1661
      %v1680 = vadd.f32 %v1566, %v1664
      %v1681 = vadd.f32 %v1571, %v1669
      %v1682 = vadd.f32 %v1574, %v1672
      %v1683 = vld [vmem:[%s1373] sm:$0xff]
      %v1684 = vld [vmem:[%s1373 + $0x10] sm:$0xff]
      %v1685 = vld [vmem:[%s1373 + $0x20] sm:$0xff]
      %v1686 = vld [vmem:[%s1373 + $0x30] sm:$0xff]
      %v1687 = vld [vmem:[%s1373 + $0x40] sm:$0xff]
      %v1688 = vld [vmem:[%s1373 + $0x50] sm:$0xff]
      %v1689 = vld [vmem:[%s1373 + $0x60] sm:$0xff]
      %v1690 = vld [vmem:[%s1373 + $0x70] sm:$0xff]
      %v1691 = vpack.c.bf16 %v1684, %v1683
      %v1692 = vpack.c.bf16 %v1686, %v1685
      %v1693 = vpack.c.bf16 %v1688, %v1687
      %v1694 = vpack.c.bf16 %v1690, %v1689
      %s1695 = scalar_lea.vmem %s6, 24
      %v1696 = vld [vmem:[%s1695] sm:$0xf]
      %v1697 = vld [vmem:[%s1695 + $0x4] sm:$0xf]
      %v1700 = vunpack.c.l.b16 %v1696
      %v1701 = vunpack.c.l.b16 %v1697
      %v1702 = vpack.c.b16 %v1701, %v1700
      %v1705 = vsel %vm1351, %v1691, 0
      %v1708 = vsel %vm1351, %v1692, 0
      %v1711 = vsel %vm1351, %v1693, 0
      %v1714 = vsel %vm1351, %v1694, 0
      %1716 = vmatprep.subr.bf16.mxu0 0
      %1717 = vmatpush1.bf16.msra.mxu0 %v1702
      %1718 = vmatprep.subr.bf16.mxu0 0
      %1719 = vmatpush1.bf16.msra.mxu0 0
      %1720 = vmatprep.subr.bf16.mxu0 0
      %1721 = vmatpush1.bf16.msra.mxu0 0
      %1722 = vmatprep.subr.bf16.mxu0 0
      %1723 = vmatpush1.bf16.msra.mxu0 0
      %1724 = vmatprep.subr.bf16.mxu0 0
      %1725 = vmatpush1.bf16.msra.mxu0 0
      %1726 = vmatprep.subr.bf16.mxu0 0
      %1727 = vmatpush1.bf16.msra.mxu0 0
      %1728 = vmatprep.subr.bf16.mxu0 0
      %1729 = vmatpush1.bf16.msra.mxu0 0
      %1730 = vmatprep.subr.bf16.mxu0 0
      %1731 = vmatpush1.bf16.msra.mxu0 0
      %1732 = vmatprep.subr.bf16.mxu0 0
      %1733 = vmatpush1.bf16.msra.mxu0 0
      %1734 = vmatprep.subr.bf16.mxu0 0
      %1735 = vmatpush1.bf16.msra.mxu0 0
      %1736 = vmatprep.subr.bf16.mxu0 0
      %1737 = vmatpush1.bf16.msra.mxu0 0
      %1738 = vmatprep.subr.bf16.mxu0 0
      %1739 = vmatpush1.bf16.msra.mxu0 0
      %1740 = vmatprep.subr.bf16.mxu0 0
      %1741 = vmatpush1.bf16.msra.mxu0 0
      %1742 = vmatprep.subr.bf16.mxu0 0
      %1743 = vmatpush1.bf16.msra.mxu0 0
      %1744 = vmatprep.subr.bf16.mxu0 0
      %1745 = vmatpush1.bf16.msra.mxu0 0
      %1746 = vmatprep.subr.bf16.mxu0 0
      %1747 = vmatpush1.bf16.msra.mxu0 0
      %1748 = vmatprep.mubr.bf16.mxu0 0
      %1749 = vmatmul.mubr.bf16.gmra.mrb[0].mxu0 %v1705
      %v1750 = vpop.f32.mrb[0].mxu0
      %v1751 = vadd.f32 0.0, %v1750
      %v1752 = vpop.f32.mrb[0].mxu0
      %v1753 = vpop.f32.mrb[0].mxu0
      %v1754 = vadd.f32 0.0, %v1753
      %v1755 = vpop.f32.mrb[0].mxu0
      %1756 = vmatprep.mubr.bf16.mxu0 0
      %1757 = vmatmul.mubr.bf16.gmra.mrb[0].mxu0 %v1708
      %v1758 = vpop.f32.mrb[0].mxu0
      %v1759 = vadd.f32 0.0, %v1758
      %v1760 = vpop.f32.mrb[0].mxu0
      %v1761 = vpop.f32.mrb[0].mxu0
      %v1762 = vadd.f32 0.0, %v1761
      %v1763 = vpop.f32.mrb[0].mxu0
      %1764 = vmatprep.mubr.bf16.mxu0 0
      %1765 = vmatmul.mubr.bf16.gmra.mrb[0].mxu0 %v1711
      %v1766 = vpop.f32.mrb[0].mxu0
      %v1767 = vadd.f32 0.0, %v1766
      %v1768 = vpop.f32.mrb[0].mxu0
      %v1769 = vpop.f32.mrb[0].mxu0
      %v1770 = vadd.f32 0.0, %v1769
      %v1771 = vpop.f32.mrb[0].mxu0
      %1772 = vmatprep.mubr.bf16.mxu0 0
      %1773 = vmatmul.mubr.bf16.gmra.mrb[0].mxu0 %v1714
      %v1774 = vpop.f32.mrb[0].mxu0
      %v1775 = vadd.f32 0.0, %v1774
      %v1776 = vpop.f32.mrb[0].mxu0
      %v1777 = vpop.f32.mrb[0].mxu0
      %v1778 = vadd.f32 0.0, %v1777
      %v1779 = vpop.f32.mrb[0].mxu0
      %1780 = vdwg.mxu0
      %v1781 = vadd.f32 %v1675, %v1751
      %v1782 = vadd.f32 %v1676, %v1754
      %v1783 = vadd.f32 %v1677, %v1759
      %v1784 = vadd.f32 %v1678, %v1762
      %v1785 = vadd.f32 %v1679, %v1767
      %v1786 = vadd.f32 %v1680, %v1770
      %v1787 = vadd.f32 %v1681, %v1775
      %v1788 = vadd.f32 %v1682, %v1778
      %v1789 = vld [vmem:[%s1373 + $0x1] sm:$0xff]
      %v1790 = vld [vmem:[%s1373 + $0x11] sm:$0xff]
      %v1791 = vld [vmem:[%s1373 + $0x21] sm:$0xff]
      %v1792 = vld [vmem:[%s1373 + $0x31] sm:$0xff]
      %v1793 = vld [vmem:[%s1373 + $0x41] sm:$0xff]
      %v1794 = vld [vmem:[%s1373 + $0x51] sm:$0xff]
      %v1795 = vld [vmem:[%s1373 + $0x61] sm:$0xff]
      %v1796 = vld [vmem:[%s1373 + $0x71] sm:$0xff]
      %v1797 = vpack.c.bf16 %v1790, %v1789
      %v1798 = vpack.c.bf16 %v1792, %v1791
      %v1799 = vpack.c.bf16 %v1794, %v1793
      %v1800 = vpack.c.bf16 %v1796, %v1795
      %s1801 = scalar_lea.vmem %s6, 32
      %v1802 = vld [vmem:[%s1801] sm:$0xf]
      %v1803 = vld [vmem:[%s1801 + $0x4] sm:$0xf]
      %v1806 = vunpack.c.l.b16 %v1802
      %v1807 = vunpack.c.l.b16 %v1803
      %v1808 = vpack.c.b16 %v1807, %v1806
      %v1811 = vsel %vm1351, %v1797, 0
      %v1814 = vsel %vm1351, %v1798, 0
      %v1817 = vsel %vm1351, %v1799, 0
      %v1820 = vsel %vm1351, %v1800, 0
      %1822 = vmatprep.subr.bf16.mxu0 0
      %1823 = vmatpush1.bf16.msra.mxu0 %v1808
      %1824 = vmatprep.subr.bf16.mxu0 0
      %1825 = vmatpush1.bf16.msra.mxu0 0
      %1826 = vmatprep.subr.bf16.mxu0 0
      %1827 = vmatpush1.bf16.msra.mxu0 0
      %1828 = vmatprep.subr.bf16.mxu0 0
      %1829 = vmatpush1.bf16.msra.mxu0 0
      %1830 = vmatprep.subr.bf16.mxu0 0
      %1831 = vmatpush1.bf16.msra.mxu0 0
      %1832 = vmatprep.subr.bf16.mxu0 0
      %1833 = vmatpush1.bf16.msra.mxu0 0
      %1834 = vmatprep.subr.bf16.mxu0 0
      %1835 = vmatpush1.bf16.msra.mxu0 0
      %1836 = vmatprep.subr.bf16.mxu0 0
      %1837 = vmatpush1.bf16.msra.mxu0 0
      %1838 = vmatprep.subr.bf16.mxu0 0
      %1839 = vmatpush1.bf16.msra.mxu0 0
      %1840 = vmatprep.subr.bf16.mxu0 0
      %1841 = vmatpush1.bf16.msra.mxu0 0
      %1842 = vmatprep.subr.bf16.mxu0 0
      %1843 = vmatpush1.bf16.msra.mxu0 0
      %1844 = vmatprep.subr.bf16.mxu0 0
      %1845 = vmatpush1.bf16.msra.mxu0 0
      %1846 = vmatprep.subr.bf16.mxu0 0
      %1847 = vmatpush1.bf16.msra.mxu0 0
      %1848 = vmatprep.subr.bf16.mxu0 0
      %1849 = vmatpush1.bf16.msra.mxu0 0
      %1850 = vmatprep.subr.bf16.mxu0 0
      %1851 = vmatpush1.bf16.msra.mxu0 0
      %1852 = vmatprep.subr.bf16.mxu0 0
      %1853 = vmatpush1.bf16.msra.mxu0 0
      %1854 = vmatprep.mubr.bf16.mxu0 0
      %1855 = vmatmul.mubr.bf16.gmra.mrb[0].mxu0 %v1811
      %v1856 = vpop.f32.mrb[0].mxu0
      %v1857 = vadd.f32 0.0, %v1856
      %v1858 = vpop.f32.mrb[0].mxu0
      %v1859 = vpop.f32.mrb[0].mxu0
      %v1860 = vadd.f32 0.0, %v1859
      %v1861 = vpop.f32.mrb[0].mxu0
      %1862 = vmatprep.mubr.bf16.mxu0 0
      %1863 = vmatmul.mubr.bf16.gmra.mrb[0].mxu0 %v1814
      %v1864 = vpop.f32.mrb[0].mxu0
      %v1865 = vadd.f32 0.0, %v1864
      %v1866 = vpop.f32.mrb[0].mxu0
      %v1867 = vpop.f32.mrb[0].mxu0
      %v1868 = vadd.f32 0.0, %v1867
      %v1869 = vpop.f32.mrb[0].mxu0
      %1870 = vmatprep.mubr.bf16.mxu0 0
      %1871 = vmatmul.mubr.bf16.gmra.mrb[0].mxu0 %v1817
      %v1872 = vpop.f32.mrb[0].mxu0
      %v1873 = vadd.f32 0.0, %v1872
      %v1874 = vpop.f32.mrb[0].mxu0
      %v1875 = vpop.f32.mrb[0].mxu0
      %v1876 = vadd.f32 0.0, %v1875
      %v1877 = vpop.f32.mrb[0].mxu0
      %1878 = vmatprep.mubr.bf16.mxu0 0
      %1879 = vmatmul.mubr.bf16.gmra.mrb[0].mxu0 %v1820
      %v1880 = vpop.f32.mrb[0].mxu0
      %v1881 = vadd.f32 0.0, %v1880
      %v1882 = vpop.f32.mrb[0].mxu0
      %v1883 = vpop.f32.mrb[0].mxu0
      %v1884 = vadd.f32 0.0, %v1883
      %v1885 = vpop.f32.mrb[0].mxu0
      %1886 = vdwg.mxu0
      %v1887 = vadd.f32 %v1781, %v1857
      %v1888 = vadd.f32 %v1782, %v1860
      %v1889 = vadd.f32 %v1783, %v1865
      %v1890 = vadd.f32 %v1784, %v1868
      %v1891 = vadd.f32 %v1785, %v1873
      %v1892 = vadd.f32 %v1786, %v1876
      %v1893 = vadd.f32 %v1787, %v1881
      %v1894 = vadd.f32 %v1788, %v1884
      %v1895 = vld [vmem:[%s1373 + $0x2] sm:$0xff]
      %v1896 = vld [vmem:[%s1373 + $0x12] sm:$0xff]
      %v1897 = vld [vmem:[%s1373 + $0x22] sm:$0xff]
      %v1898 = vld [vmem:[%s1373 + $0x32] sm:$0xff]
      %v1899 = vld [vmem:[%s1373 + $0x42] sm:$0xff]
      %v1900 = vld [vmem:[%s1373 + $0x52] sm:$0xff]
      %v1901 = vld [vmem:[%s1373 + $0x62] sm:$0xff]
      %v1902 = vld [vmem:[%s1373 + $0x72] sm:$0xff]
      %v1903 = vpack.c.bf16 %v1896, %v1895
      %v1904 = vpack.c.bf16 %v1898, %v1897
      %v1905 = vpack.c.bf16 %v1900, %v1899
      %v1906 = vpack.c.bf16 %v1902, %v1901
      %s1907 = scalar_lea.vmem %s6, 40
      %v1908 = vld [vmem:[%s1907] sm:$0xf]
      %v1909 = vld [vmem:[%s1907 + $0x4] sm:$0xf]
      %v1912 = vunpack.c.l.b16 %v1908
      %v1913 = vunpack.c.l.b16 %v1909
      %v1914 = vpack.c.b16 %v1913, %v1912
      %v1917 = vsel %vm1351, %v1903, 0
      %v1920 = vsel %vm1351, %v1904, 0
      %v1923 = vsel %vm1351, %v1905, 0
      %v1926 = vsel %vm1351, %v1906, 0
      %1928 = vmatprep.subr.bf16.mxu0 0
      %1929 = vmatpush1.bf16.msra.mxu0 %v1914
      %1930 = vmatprep.subr.bf16.mxu0 0
      %1931 = vmatpush1.bf16.msra.mxu0 0
      %1932 = vmatprep.subr.bf16.mxu0 0
      %1933 = vmatpush1.bf16.msra.mxu0 0
      %1934 = vmatprep.subr.bf16.mxu0 0
      %1935 = vmatpush1.bf16.msra.mxu0 0
      %1936 = vmatprep.subr.bf16.mxu0 0
      %1937 = vmatpush1.bf16.msra.mxu0 0
      %1938 = vmatprep.subr.bf16.mxu0 0
      %1939 = vmatpush1.bf16.msra.mxu0 0
      %1940 = vmatprep.subr.bf16.mxu0 0
      %1941 = vmatpush1.bf16.msra.mxu0 0
      %1942 = vmatprep.subr.bf16.mxu0 0
      %1943 = vmatpush1.bf16.msra.mxu0 0
      %1944 = vmatprep.subr.bf16.mxu0 0
      %1945 = vmatpush1.bf16.msra.mxu0 0
      %1946 = vmatprep.subr.bf16.mxu0 0
      %1947 = vmatpush1.bf16.msra.mxu0 0
      %1948 = vmatprep.subr.bf16.mxu0 0
      %1949 = vmatpush1.bf16.msra.mxu0 0
      %1950 = vmatprep.subr.bf16.mxu0 0
      %1951 = vmatpush1.bf16.msra.mxu0 0
      %1952 = vmatprep.subr.bf16.mxu0 0
      %1953 = vmatpush1.bf16.msra.mxu0 0
      %1954 = vmatprep.subr.bf16.mxu0 0
      %1955 = vmatpush1.bf16.msra.mxu0 0
      %1956 = vmatprep.subr.bf16.mxu0 0
      %1957 = vmatpush1.bf16.msra.mxu0 0
      %1958 = vmatprep.subr.bf16.mxu0 0
      %1959 = vmatpush1.bf16.msra.mxu0 0
      %1960 = vmatprep.mubr.bf16.mxu0 0
      %1961 = vmatmul.mubr.bf16.gmra.mrb[0].mxu0 %v1917
      %v1962 = vpop.f32.mrb[0].mxu0
      %v1963 = vadd.f32 0.0, %v1962
      %v1964 = vpop.f32.mrb[0].mxu0
      %v1965 = vpop.f32.mrb[0].mxu0
      %v1966 = vadd.f32 0.0, %v1965
      %v1967 = vpop.f32.mrb[0].mxu0
      %1968 = vmatprep.mubr.bf16.mxu0 0
      %1969 = vmatmul.mubr.bf16.gmra.mrb[0].mxu0 %v1920
      %v1970 = vpop.f32.mrb[0].mxu0
      %v1971 = vadd.f32 0.0, %v1970
      %v1972 = vpop.f32.mrb[0].mxu0
      %v1973 = vpop.f32.mrb[0].mxu0
      %v1974 = vadd.f32 0.0, %v1973
      %v1975 = vpop.f32.mrb[0].mxu0
      %1976 = vmatprep.mubr.bf16.mxu0 0
      %1977 = vmatmul.mubr.bf16.gmra.mrb[0].mxu0 %v1923
      %v1978 = vpop.f32.mrb[0].mxu0
      %v1979 = vadd.f32 0.0, %v1978
      %v1980 = vpop.f32.mrb[0].mxu0
      %v1981 = vpop.f32.mrb[0].mxu0
      %v1982 = vadd.f32 0.0, %v1981
      %v1983 = vpop.f32.mrb[0].mxu0
      %1984 = vmatprep.mubr.bf16.mxu0 0
      %1985 = vmatmul.mubr.bf16.gmra.mrb[0].mxu0 %v1926
      %v1986 = vpop.f32.mrb[0].mxu0
      %v1987 = vadd.f32 0.0, %v1986
      %v1988 = vpop.f32.mrb[0].mxu0
      %v1989 = vpop.f32.mrb[0].mxu0
      %v1990 = vadd.f32 0.0, %v1989
      %v1991 = vpop.f32.mrb[0].mxu0
      %1992 = vdwg.mxu0
      %v1993 = vadd.f32 %v1887, %v1963
      %v1994 = vadd.f32 %v1888, %v1966
      %v1995 = vadd.f32 %v1889, %v1971
      %v1996 = vadd.f32 %v1890, %v1974
      %v1997 = vadd.f32 %v1891, %v1979
      %v1998 = vadd.f32 %v1892, %v1982
      %v1999 = vadd.f32 %v1893, %v1987
      %v2000 = vadd.f32 %v1894, %v1990
      %s2001 = scalar_lea.vmem [#allocation2], 32
      %v2002 = vld [vmem:[%s2001] sm:$0xff]
      %v2003 = vld [vmem:[%s2001 + $0x10] sm:$0xff]
      %v2004 = vld [vmem:[%s2001 + $0x20] sm:$0xff]
      %v2005 = vld [vmem:[%s2001 + $0x30] sm:$0xff]
      %v2006 = vld [vmem:[%s2001 + $0x40] sm:$0xff]
      %v2007 = vld [vmem:[%s2001 + $0x50] sm:$0xff]
      %v2008 = vld [vmem:[%s2001 + $0x60] sm:$0xff]
      %v2009 = vld [vmem:[%s2001 + $0x70] sm:$0xff]
      %v2010 = vpack.c.bf16 %v2003, %v2002
      %v2011 = vpack.c.bf16 %v2005, %v2004
      %v2012 = vpack.c.bf16 %v2007, %v2006
      %v2013 = vpack.c.bf16 %v2009, %v2008
      %s2014 = scalar_lea.vmem %s6, 48
      %v2015 = vld [vmem:[%s2014] sm:$0xf]
      %v2016 = vld [vmem:[%s2014 + $0x4] sm:$0xf]
      %v2019 = vunpack.c.l.b16 %v2015
      %v2020 = vunpack.c.l.b16 %v2016
      %v2021 = vpack.c.b16 %v2020, %v2019
      %v2024 = vsel %vm1351, %v2010, 0
      %v2027 = vsel %vm1351, %v2011, 0
      %v2030 = vsel %vm1351, %v2012, 0
      %v2033 = vsel %vm1351, %v2013, 0
      %2035 = vmatprep.subr.bf16.mxu0 0
      %2036 = vmatpush1.bf16.msra.mxu0 %v2021
      %2037 = vmatprep.subr.bf16.mxu0 0
      %2038 = vmatpush1.bf16.msra.mxu0 0
      %2039 = vmatprep.subr.bf16.mxu0 0
      %2040 = vmatpush1.bf16.msra.mxu0 0
      %2041 = vmatprep.subr.bf16.mxu0 0
      %2042 = vmatpush1.bf16.msra.mxu0 0
      %2043 = vmatprep.subr.bf16.mxu0 0
      %2044 = vmatpush1.bf16.msra.mxu0 0
      %2045 = vmatprep.subr.bf16.mxu0 0
      %2046 = vmatpush1.bf16.msra.mxu0 0
      %2047 = vmatprep.subr.bf16.mxu0 0
      %2048 = vmatpush1.bf16.msra.mxu0 0
      %2049 = vmatprep.subr.bf16.mxu0 0
      %2050 = vmatpush1.bf16.msra.mxu0 0
      %2051 = vmatprep.subr.bf16.mxu0 0
      %2052 = vmatpush1.bf16.msra.mxu0 0
      %2053 = vmatprep.subr.bf16.mxu0 0
      %2054 = vmatpush1.bf16.msra.mxu0 0
      %2055 = vmatprep.subr.bf16.mxu0 0
      %2056 = vmatpush1.bf16.msra.mxu0 0
      %2057 = vmatprep.subr.bf16.mxu0 0
      %2058 = vmatpush1.bf16.msra.mxu0 0
      %2059 = vmatprep.subr.bf16.mxu0 0
      %2060 = vmatpush1.bf16.msra.mxu0 0
      %2061 = vmatprep.subr.bf16.mxu0 0
      %2062 = vmatpush1.bf16.msra.mxu0 0
      %2063 = vmatprep.subr.bf16.mxu0 0
      %2064 = vmatpush1.bf16.msra.mxu0 0
      %2065 = vmatprep.subr.bf16.mxu0 0
      %2066 = vmatpush1.bf16.msra.mxu0 0
      %2067 = vmatprep.mubr.bf16.mxu0 0
      %2068 = vmatmul.mubr.bf16.gmra.mrb[0].mxu0 %v2024
      %v2069 = vpop.f32.mrb[0].mxu0
      %v2070 = vadd.f32 0.0, %v2069
      %v2071 = vpop.f32.mrb[0].mxu0
      %v2072 = vpop.f32.mrb[0].mxu0
      %v2073 = vadd.f32 0.0, %v2072
      %v2074 = vpop.f32.mrb[0].mxu0
      %2075 = vmatprep.mubr.bf16.mxu0 0
      %2076 = vmatmul.mubr.bf16.gmra.mrb[0].mxu0 %v2027
      %v2077 = vpop.f32.mrb[0].mxu0
      %v2078 = vadd.f32 0.0, %v2077
      %v2079 = vpop.f32.mrb[0].mxu0
      %v2080 = vpop.f32.mrb[0].mxu0
      %v2081 = vadd.f32 0.0, %v2080
      %v2082 = vpop.f32.mrb[0].mxu0
      %2083 = vmatprep.mubr.bf16.mxu0 0
      %2084 = vmatmul.mubr.bf16.gmra.mrb[0].mxu0 %v2030
      %v2085 = vpop.f32.mrb[0].mxu0
      %v2086 = vadd.f32 0.0, %v2085
      %v2087 = vpop.f32.mrb[0].mxu0
      %v2088 = vpop.f32.mrb[0].mxu0
      %v2089 = vadd.f32 0.0, %v2088
      %v2090 = vpop.f32.mrb[0].mxu0
      %2091 = vmatprep.mubr.bf16.mxu0 0
      %2092 = vmatmul.mubr.bf16.gmra.mrb[0].mxu0 %v2033
      %v2093 = vpop.f32.mrb[0].mxu0
      %v2094 = vadd.f32 0.0, %v2093
      %v2095 = vpop.f32.mrb[0].mxu0
      %v2096 = vpop.f32.mrb[0].mxu0
      %v2097 = vadd.f32 0.0, %v2096
      %v2098 = vpop.f32.mrb[0].mxu0
      %2099 = vdwg.mxu0
      %v2100 = vadd.f32 %v1993, %v2070
      %v2101 = vadd.f32 %v1994, %v2073
      %v2102 = vadd.f32 %v1995, %v2078
      %v2103 = vadd.f32 %v1996, %v2081
      %v2104 = vadd.f32 %v1997, %v2086
      %v2105 = vadd.f32 %v1998, %v2089
      %v2106 = vadd.f32 %v1999, %v2094
      %v2107 = vadd.f32 %v2000, %v2097
      %v2108 = vld [vmem:[%s2001 + $0x1] sm:$0xff]
      %v2109 = vld [vmem:[%s2001 + $0x11] sm:$0xff]
      %v2110 = vld [vmem:[%s2001 + $0x21] sm:$0xff]
      %v2111 = vld [vmem:[%s2001 + $0x31] sm:$0xff]
      %v2112 = vld [vmem:[%s2001 + $0x41] sm:$0xff]
      %v2113 = vld [vmem:[%s2001 + $0x51] sm:$0xff]
      %v2114 = vld [vmem:[%s2001 + $0x61] sm:$0xff]
      %v2115 = vld [vmem:[%s2001 + $0x71] sm:$0xff]
      %v2116 = vpack.c.bf16 %v2109, %v2108
      %v2117 = vpack.c.bf16 %v2111, %v2110
      %v2118 = vpack.c.bf16 %v2113, %v2112
      %v2119 = vpack.c.bf16 %v2115, %v2114
      %s2120 = scalar_lea.vmem %s6, 56
      %v2121 = vld [vmem:[%s2120] sm:$0xf]
      %v2122 = vld [vmem:[%s2120 + $0x4] sm:$0xf]
      %v2125 = vunpack.c.l.b16 %v2121
      %v2126 = vunpack.c.l.b16 %v2122
      %v2127 = vpack.c.b16 %v2126, %v2125
      %v2130 = vsel %vm1351, %v2116, 0
      %v2133 = vsel %vm1351, %v2117, 0
      %v2136 = vsel %vm1351, %v2118, 0
      %v2139 = vsel %vm1351, %v2119, 0
      %2141 = vmatprep.subr.bf16.mxu0 0
      %2142 = vmatpush1.bf16.msra.mxu0 %v2127
      %2143 = vmatprep.subr.bf16.mxu0 0
      %2144 = vmatpush1.bf16.msra.mxu0 0
      %2145 = vmatprep.subr.bf16.mxu0 0
      %2146 = vmatpush1.bf16.msra.mxu0 0
      %2147 = vmatprep.subr.bf16.mxu0 0
      %2148 = vmatpush1.bf16.msra.mxu0 0
      %2149 = vmatprep.subr.bf16.mxu0 0
      %2150 = vmatpush1.bf16.msra.mxu0 0
      %2151 = vmatprep.subr.bf16.mxu0 0
      %2152 = vmatpush1.bf16.msra.mxu0 0
      %2153 = vmatprep.subr.bf16.mxu0 0
      %2154 = vmatpush1.bf16.msra.mxu0 0
      %2155 = vmatprep.subr.bf16.mxu0 0
      %2156 = vmatpush1.bf16.msra.mxu0 0
      %2157 = vmatprep.subr.bf16.mxu0 0
      %2158 = vmatpush1.bf16.msra.mxu0 0
      %2159 = vmatprep.subr.bf16.mxu0 0
      %2160 = vmatpush1.bf16.msra.mxu0 0
      %2161 = vmatprep.subr.bf16.mxu0 0
      %2162 = vmatpush1.bf16.msra.mxu0 0
      %2163 = vmatprep.subr.bf16.mxu0 0
      %2164 = vmatpush1.bf16.msra.mxu0 0
      %2165 = vmatprep.subr.bf16.mxu0 0
      %2166 = vmatpush1.bf16.msra.mxu0 0
      %2167 = vmatprep.subr.bf16.mxu0 0
      %2168 = vmatpush1.bf16.msra.mxu0 0
      %2169 = vmatprep.subr.bf16.mxu0 0
      %2170 = vmatpush1.bf16.msra.mxu0 0
      %2171 = vmatprep.subr.bf16.mxu0 0
      %2172 = vmatpush1.bf16.msra.mxu0 0
      %2173 = vmatprep.mubr.bf16.mxu0 0
      %2174 = vmatmul.mubr.bf16.gmra.mrb[0].mxu0 %v2130
      %v2175 = vpop.f32.mrb[0].mxu0
      %v2176 = vadd.f32 0.0, %v2175
      %v2177 = vpop.f32.mrb[0].mxu0
      %v2178 = vpop.f32.mrb[0].mxu0
      %v2179 = vadd.f32 0.0, %v2178
      %v2180 = vpop.f32.mrb[0].mxu0
      %2181 = vmatprep.mubr.bf16.mxu0 0
      %2182 = vmatmul.mubr.bf16.gmra.mrb[0].mxu0 %v2133
      %v2183 = vpop.f32.mrb[0].mxu0
      %v2184 = vadd.f32 0.0, %v2183
      %v2185 = vpop.f32.mrb[0].mxu0
      %v2186 = vpop.f32.mrb[0].mxu0
      %v2187 = vadd.f32 0.0, %v2186
      %v2188 = vpop.f32.mrb[0].mxu0
      %2189 = vmatprep.mubr.bf16.mxu0 0
      %2190 = vmatmul.mubr.bf16.gmra.mrb[0].mxu0 %v2136
      %v2191 = vpop.f32.mrb[0].mxu0
      %v2192 = vadd.f32 0.0, %v2191
      %v2193 = vpop.f32.mrb[0].mxu0
      %v2194 = vpop.f32.mrb[0].mxu0
      %v2195 = vadd.f32 0.0, %v2194
      %v2196 = vpop.f32.mrb[0].mxu0
      %2197 = vmatprep.mubr.bf16.mxu0 0
      %2198 = vmatmul.mubr.bf16.gmra.mrb[0].mxu0 %v2139
      %v2199 = vpop.f32.mrb[0].mxu0
      %v2200 = vadd.f32 0.0, %v2199
      %v2201 = vpop.f32.mrb[0].mxu0
      %v2202 = vpop.f32.mrb[0].mxu0
      %v2203 = vadd.f32 0.0, %v2202
      %v2204 = vpop.f32.mrb[0].mxu0
      %2205 = vdwg.mxu0
      %v2206 = vadd.f32 %v2100, %v2176
      %v2207 = vadd.f32 %v2101, %v2179
      %v2208 = vadd.f32 %v2102, %v2184
      %v2209 = vadd.f32 %v2103, %v2187
      %v2210 = vadd.f32 %v2104, %v2192
      %v2211 = vadd.f32 %v2105, %v2195
      %v2212 = vadd.f32 %v2106, %v2200
      %v2213 = vadd.f32 %v2107, %v2203
      %v2214 = vld [vmem:[%s2001 + $0x2] sm:$0xff]
      %v2215 = vld [vmem:[%s2001 + $0x12] sm:$0xff]
      %v2216 = vld [vmem:[%s2001 + $0x22] sm:$0xff]
      %v2217 = vld [vmem:[%s2001 + $0x32] sm:$0xff]
      %v2218 = vld [vmem:[%s2001 + $0x42] sm:$0xff]
      %v2219 = vld [vmem:[%s2001 + $0x52] sm:$0xff]
      %v2220 = vld [vmem:[%s2001 + $0x62] sm:$0xff]
      %v2221 = vld [vmem:[%s2001 + $0x72] sm:$0xff]
      %v2222 = vpack.c.bf16 %v2215, %v2214
      %v2223 = vpack.c.bf16 %v2217, %v2216
      %v2224 = vpack.c.bf16 %v2219, %v2218
      %v2225 = vpack.c.bf16 %v2221, %v2220
      %s2226 = scalar_lea.vmem %s6, 64
      %v2227 = vld [vmem:[%s2226] sm:$0xf]
      %v2228 = vld [vmem:[%s2226 + $0x4] sm:$0xf]
      %v2231 = vunpack.c.l.b16 %v2227
      %v2232 = vunpack.c.l.b16 %v2228
      %v2233 = vpack.c.b16 %v2232, %v2231
      %v2236 = vsel %vm1351, %v2222, 0
      %v2239 = vsel %vm1351, %v2223, 0
      %v2242 = vsel %vm1351, %v2224, 0
      %v2245 = vsel %vm1351, %v2225, 0
      %2247 = vmatprep.subr.bf16.mxu0 0
      %2248 = vmatpush1.bf16.msra.mxu0 %v2233
      %2249 = vmatprep.subr.bf16.mxu0 0
      %2250 = vmatpush1.bf16.msra.mxu0 0
      %2251 = vmatprep.subr.bf16.mxu0 0
      %2252 = vmatpush1.bf16.msra.mxu0 0
      %2253 = vmatprep.subr.bf16.mxu0 0
      %2254 = vmatpush1.bf16.msra.mxu0 0
      %2255 = vmatprep.subr.bf16.mxu0 0
      %2256 = vmatpush1.bf16.msra.mxu0 0
      %2257 = vmatprep.subr.bf16.mxu0 0
      %2258 = vmatpush1.bf16.msra.mxu0 0
      %2259 = vmatprep.subr.bf16.mxu0 0
      %2260 = vmatpush1.bf16.msra.mxu0 0
      %2261 = vmatprep.subr.bf16.mxu0 0
      %2262 = vmatpush1.bf16.msra.mxu0 0
      %2263 = vmatprep.subr.bf16.mxu0 0
      %2264 = vmatpush1.bf16.msra.mxu0 0
      %2265 = vmatprep.subr.bf16.mxu0 0
      %2266 = vmatpush1.bf16.msra.mxu0 0
      %2267 = vmatprep.subr.bf16.mxu0 0
      %2268 = vmatpush1.bf16.msra.mxu0 0
      %2269 = vmatprep.subr.bf16.mxu0 0
      %2270 = vmatpush1.bf16.msra.mxu0 0
      %2271 = vmatprep.subr.bf16.mxu0 0
      %2272 = vmatpush1.bf16.msra.mxu0 0
      %2273 = vmatprep.subr.bf16.mxu0 0
      %2274 = vmatpush1.bf16.msra.mxu0 0
      %2275 = vmatprep.subr.bf16.mxu0 0
      %2276 = vmatpush1.bf16.msra.mxu0 0
      %2277 = vmatprep.subr.bf16.mxu0 0
      %2278 = vmatpush1.bf16.msra.mxu0 0
      %2279 = vmatprep.mubr.bf16.mxu0 0
      %2280 = vmatmul.mubr.bf16.gmra.mrb[0].mxu0 %v2236
      %v2281 = vpop.f32.mrb[0].mxu0
      %v2282 = vadd.f32 0.0, %v2281
      %v2283 = vpop.f32.mrb[0].mxu0
      %v2284 = vpop.f32.mrb[0].mxu0
      %v2285 = vadd.f32 0.0, %v2284
      %v2286 = vpop.f32.mrb[0].mxu0
      %2287 = vmatprep.mubr.bf16.mxu0 0
      %2288 = vmatmul.mubr.bf16.gmra.mrb[0].mxu0 %v2239
      %v2289 = vpop.f32.mrb[0].mxu0
      %v2290 = vadd.f32 0.0, %v2289
      %v2291 = vpop.f32.mrb[0].mxu0
      %v2292 = vpop.f32.mrb[0].mxu0
      %v2293 = vadd.f32 0.0, %v2292
      %v2294 = vpop.f32.mrb[0].mxu0
      %2295 = vmatprep.mubr.bf16.mxu0 0
      %2296 = vmatmul.mubr.bf16.gmra.mrb[0].mxu0 %v2242
      %v2297 = vpop.f32.mrb[0].mxu0
      %v2298 = vadd.f32 0.0, %v2297
      %v2299 = vpop.f32.mrb[0].mxu0
      %v2300 = vpop.f32.mrb[0].mxu0
      %v2301 = vadd.f32 0.0, %v2300
      %v2302 = vpop.f32.mrb[0].mxu0
      %2303 = vmatprep.mubr.bf16.mxu0 0
      %2304 = vmatmul.mubr.bf16.gmra.mrb[0].mxu0 %v2245
      %v2305 = vpop.f32.mrb[0].mxu0
      %v2306 = vadd.f32 0.0, %v2305
      %v2307 = vpop.f32.mrb[0].mxu0
      %v2308 = vpop.f32.mrb[0].mxu0
      %v2309 = vadd.f32 0.0, %v2308
      %v2310 = vpop.f32.mrb[0].mxu0
      %2311 = vdwg.mxu0
      %v2312 = vadd.f32 %v2206, %v2282
      %v2313 = vadd.f32 %v2207, %v2285
      %v2314 = vadd.f32 %v2208, %v2290
      %v2315 = vadd.f32 %v2209, %v2293
      %v2316 = vadd.f32 %v2210, %v2298
      %v2317 = vadd.f32 %v2211, %v2301
      %v2318 = vadd.f32 %v2212, %v2306
      %v2319 = vadd.f32 %v2213, %v2309
      %v2320 = vld [vmem:[%s7] sm:$0x1]
      %v2322 = vlaneseq
      %v2323 = vshrl.u32 %v2322, 7
      %v2324 = vsub.s32 0, %v2323
      %v2325 = vrot.slane %v2320, %v2324
      %v2327 = vadd.f32 %v2312, %v2325
      %v2328 = vadd.f32 %v2313, %v2325
      %v2329 = vadd.f32 %v2314, %v2325
      %v2330 = vadd.f32 %v2315, %v2325
      %v2331 = vadd.f32 %v2316, %v2325
      %v2332 = vadd.f32 %v2317, %v2325
      %v2333 = vadd.f32 %v2318, %v2325
      %v2334 = vadd.f32 %v2319, %v2325
      %v2335 = vld [vmem:[%s815 + $0x1] sm:$0xff]
      %v2336 = vld [vmem:[%s815 + $0x11] sm:$0xff]
      %v2337 = vld [vmem:[%s815 + $0x21] sm:$0xff]
      %v2338 = vld [vmem:[%s815 + $0x31] sm:$0xff]
      %v2339 = vld [vmem:[%s815 + $0x41] sm:$0xff]
      %v2340 = vld [vmem:[%s815 + $0x51] sm:$0xff]
      %v2341 = vld [vmem:[%s815 + $0x61] sm:$0xff]
      %v2342 = vld [vmem:[%s815 + $0x71] sm:$0xff]
      %v2343 = vpack.c.bf16 %v2336, %v2335
      %v2344 = vpack.c.bf16 %v2338, %v2337
      %v2345 = vpack.c.bf16 %v2340, %v2339
      %v2346 = vpack.c.bf16 %v2342, %v2341
      %v2347 = vld [vmem:[%s8] sm:$0xf]
      %v2348 = vld [vmem:[%s9] sm:$0x1]
      %v2350 = vlaneseq
      %v2351 = vshrl.u32 %v2350, 7
      %v2352 = vsub.s32 0, %v2351
      %v2353 = vrot.slane %v2348, %v2352
      %v2356 = vsel %vm448, %v2343, 0
      %v2359 = vsel %vm448, %v2344, 0
      %v2362 = vsel %vm448, %v2345, 0
      %v2365 = vsel %vm448, %v2346, 0
      %v2368 = vsel %vm461, %v2347, 0
      %2370 = vmatprep.subr.bf16.mxu0 0
      %2371 = vmatpush1.bf16.msra.mxu0 %v2368
      %2372 = vmatprep.subr.bf16.mxu0 0
      %2373 = vmatpush1.bf16.msra.mxu0 0
      %2374 = vmatprep.subr.bf16.mxu0 0
      %2375 = vmatpush1.bf16.msra.mxu0 0
      %2376 = vmatprep.subr.bf16.mxu0 0
      %2377 = vmatpush1.bf16.msra.mxu0 0
      %2378 = vmatprep.subr.bf16.mxu0 0
      %2379 = vmatpush1.bf16.msra.mxu0 0
      %2380 = vmatprep.subr.bf16.mxu0 0
      %2381 = vmatpush1.bf16.msra.mxu0 0
      %2382 = vmatprep.subr.bf16.mxu0 0
      %2383 = vmatpush1.bf16.msra.mxu0 0
      %2384 = vmatprep.subr.bf16.mxu0 0
      %2385 = vmatpush1.bf16.msra.mxu0 0
      %2386 = vmatprep.subr.bf16.mxu0 0
      %2387 = vmatpush1.bf16.msra.mxu0 0
      %2388 = vmatprep.subr.bf16.mxu0 0
      %2389 = vmatpush1.bf16.msra.mxu0 0
      %2390 = vmatprep.subr.bf16.mxu0 0
      %2391 = vmatpush1.bf16.msra.mxu0 0
      %2392 = vmatprep.subr.bf16.mxu0 0
      %2393 = vmatpush1.bf16.msra.mxu0 0
      %2394 = vmatprep.subr.bf16.mxu0 0
      %2395 = vmatpush1.bf16.msra.mxu0 0
      %2396 = vmatprep.subr.bf16.mxu0 0
      %2397 = vmatpush1.bf16.msra.mxu0 0
      %2398 = vmatprep.subr.bf16.mxu0 0
      %2399 = vmatpush1.bf16.msra.mxu0 0
      %2400 = vmatprep.subr.bf16.mxu0 0
      %2401 = vmatpush1.bf16.msra.mxu0 0
      %2402 = vmatprep.mubr.bf16.mxu0 0
      %2403 = vmatmul.mubr.bf16.gmra.mrb[0].mxu0 %v2356
      %v2404 = vpop.f32.mrb[0].mxu0
      %v2405 = vadd.f32 %v2353, %v2404
      %v2406 = vpop.f32.mrb[0].mxu0
      %v2407 = vpop.f32.mrb[0].mxu0
      %v2408 = vadd.f32 %v2353, %v2407
      %v2409 = vpop.f32.mrb[0].mxu0
      %2410 = vmatprep.mubr.bf16.mxu0 0
      %2411 = vmatmul.mubr.bf16.gmra.mrb[0].mxu0 %v2359
      %v2412 = vpop.f32.mrb[0].mxu0
      %v2413 = vadd.f32 %v2353, %v2412
      %v2414 = vpop.f32.mrb[0].mxu0
      %v2415 = vpop.f32.mrb[0].mxu0
      %v2416 = vadd.f32 %v2353, %v2415
      %v2417 = vpop.f32.mrb[0].mxu0
      %2418 = vmatprep.mubr.bf16.mxu0 0
      %2419 = vmatmul.mubr.bf16.gmra.mrb[0].mxu0 %v2362
      %v2420 = vpop.f32.mrb[0].mxu0
      %v2421 = vadd.f32 %v2353, %v2420
      %v2422 = vpop.f32.mrb[0].mxu0
      %v2423 = vpop.f32.mrb[0].mxu0
      %v2424 = vadd.f32 %v2353, %v2423
      %v2425 = vpop.f32.mrb[0].mxu0
      %2426 = vmatprep.mubr.bf16.mxu0 0
      %2427 = vmatmul.mubr.bf16.gmra.mrb[0].mxu0 %v2365
      %v2428 = vpop.f32.mrb[0].mxu0
      %v2429 = vadd.f32 %v2353, %v2428
      %v2430 = vpop.f32.mrb[0].mxu0
      %v2431 = vpop.f32.mrb[0].mxu0
      %v2432 = vadd.f32 %v2353, %v2431
      %v2433 = vpop.f32.mrb[0].mxu0
      %2434 = vdwg.mxu0
      %v2435 = vadd.f32 %v2327, %v2405
      %v2436 = vadd.f32 %v2328, %v2408
      %v2437 = vadd.f32 %v2329, %v2413
      %v2438 = vadd.f32 %v2330, %v2416
      %v2439 = vadd.f32 %v2331, %v2421
      %v2440 = vadd.f32 %v2332, %v2424
      %v2441 = vadd.f32 %v2333, %v2429
      %v2442 = vadd.f32 %v2334, %v2432
      %v2443 = vmax.f32 %v2435, 0.0
      %v2444 = vmax.f32 %v2436, 0.0
      %v2445 = vmax.f32 %v2437, 0.0
      %v2446 = vmax.f32 %v2438, 0.0
      %v2447 = vmax.f32 %v2439, 0.0
      %v2448 = vmax.f32 %v2440, 0.0
      %v2449 = vmax.f32 %v2441, 0.0
      %v2450 = vmax.f32 %v2442, 0.0
      %2451 = vst.msk [vmem:[%s419] sm:$0xff] %vm1351, %v2443
      %2452 = vst.msk [vmem:[%s419 + $0x8] sm:$0xff] %vm1351, %v2444
      %2453 = vst.msk [vmem:[%s419 + $0x10] sm:$0xff] %vm1351, %v2445
      %2454 = vst.msk [vmem:[%s419 + $0x18] sm:$0xff] %vm1351, %v2446
      %2455 = vst.msk [vmem:[%s419 + $0x20] sm:$0xff] %vm1351, %v2447
      %2456 = vst.msk [vmem:[%s419 + $0x28] sm:$0xff] %vm1351, %v2448
      %2457 = vst.msk [vmem:[%s419 + $0x30] sm:$0xff] %vm1351, %v2449
      %2458 = vst.msk [vmem:[%s419 + $0x38] sm:$0xff] %vm1351, %v2450
      %p2459 = scmp.lt.s32.totalorder %s21, 1
      %s2460 = scalar_select %p2459, %s21, 1
      %s2461 = smul.addr %s2460, 8
      %s2462 = smul.addr %s2461, 8
      %s2463 = scalar_lea.vmem %s10, %s2462
      // Predicated region
      $region61: #{tpu_custom_call.1} parent=59 // pred_check
        %p2464 = pneg %p269
      $region62: #{tpu_custom_call.1} parent=59 // pred_check_branch
        %2466 = sbr.rel (%p2464) target = $region64
      $region63: #{tpu_custom_call.1} parent=59 // pred_region
        _
      $region64: #{tpu_custom_call.1} parent=59 // pred_fallthru
        _
    $region60: #{tpu_custom_call.1} parent=5 // pred_fallthru
      _
    %p2467 = scmp.le.s32.totalorder 2, %s16
    // Predicated region
    $region65: #{tpu_custom_call.1} parent=5 // pred_check
      %p2468 = pneg %p2467
    $region66: #{tpu_custom_call.1} parent=5 // pred_check_branch
      %2470 = sbr.rel (%p2468) target = $region68
    $region67: #{tpu_custom_call.1} parent=5 // pred_region
      %s2471 = ssub.s32 %s16, 2
      // Predicated region
      $region69: #{tpu_custom_call.1} parent=67 // pred_check
        %p2472 = pneg %p275
      $region70: #{tpu_custom_call.1} parent=67 // pred_check_branch
        %2474 = sbr.rel (%p2472) target = $region72
      $region71: #{tpu_custom_call.1} parent=67 // pred_region
        %p2475 = scmp.lt.s32.totalorder %s22, 1
        %s2476 = scalar_select %p2475, %s22, 1
        %s2477 = smul.addr %s2476, 8
        %s2478 = smul.addr %s2477, 8
        %s2479 = scalar_lea.vmem %s10, %s2478
      $region72: #{tpu_custom_call.1} parent=67 // pred_fallthru
        _
    $region68: #{tpu_custom_call.1} parent=5 // pred_fallthru
      _
  $region6: #{tpu_custom_call.1} parent=0 // loop_footer
    %s20 = sadd.s32 1, %s16
  $region7: #{tpu_custom_call.1} parent=0 // loop_footer_branch
    %15 = sbr.rel target = $region3
  $region8: #{tpu_custom_call.1} parent=0 // loop_exit
    _

</llo_original>
